<compile_context>
chip_gen: v5e
topology: v5e:2x2
jax: 0.10.0
libtpu: 0.0.40
codegen_flags: <defaults>
</compile_context>

<pallas_src>
import functools

import jax
import jax.numpy as jnp
from jax.experimental import pallas as pl
from jax.experimental.pallas import tpu as pltpu

# nn.LeakyReLU() default negative_slope; change here if the original model used another.
_LEAKY_SLOPE = 0.01


def _round_up(x, m):
    return (x + m - 1) // m * m


def _leaky_relu(x, slope=_LEAKY_SLOPE):
    return jnp.where(x >= 0, x, slope * x)


# ----------------------------- Pallas kernel --------------------------------

def realnvp_f_kernel(x_ref, mask_ref, W1_ref, b1_ref, W2_ref, b2_ref,
                     W3_ref, b3_ref, z_ref, logdet_ref, *, num_layers, dim):
    """Whole inverse flow (RealNVP.f) for one batch tile, all layers in-kernel.

    Shapes (TB = batch tile, D = feature dim, HP = round_up(2H,128)):
      x_ref      (TB, D)      f32
      mask_ref   (L, 1, D)    f32
      W1_ref     (L, D, HP)   bf16  (s|t first layers concatenated)
      b1_ref     (L, 1, HP)   f32
      W2_ref     (L, HP, HP)  bf16  (block-diag [sW2 0; 0 tW2])
      b2_ref     (L, 1, HP)   f32
      W3_ref     (L, HP, 2D)  bf16  (s-out in cols [0,D), t-out in cols [D,2D))
      b3_ref     (L, 1, 2D)   f32
      z_ref      (TB, D)      f32
      logdet_ref (TB, 1)      f32
    """
    z = x_ref[...]                                      # (TB, D) f32
    tb = z.shape[0]
    logdet = jnp.zeros((tb, 1), jnp.float32)
    wdt = W1_ref.dtype

    # f(): iterate coupling layers in reverse.  L is small -> static unroll is fine.
    # TODO(synk): for production L / weight sizes move the layer loop onto a trailing
    # "arbitrary" grid axis (index_map k -> L-1-k) with per-layer weight BlockSpecs and
    # z/logdet carried in VMEM scratch, so only one layer's weights is resident at a time.
    for i in reversed(range(num_layers)):
        m = mask_ref[i]                                 # (1, D)
        one_m = 1.0 - m
        z_masked = m * z                                # z_ = mask[i] * z

        # Fused s|t MLP: 3 matmuls instead of 6 (bf16 into MXU, f32 accumulate).
        h = jnp.dot(z_masked.astype(wdt), W1_ref[i],
                    preferred_element_type=jnp.float32) + b1_ref[i]
        h = _leaky_relu(h)
        h = jnp.dot(h.astype(wdt), W2_ref[i],
                    preferred_element_type=jnp.float32) + b2_ref[i]
        h = _leaky_relu(h)
        st = jnp.dot(h.astype(wdt), W3_ref[i],
                     preferred_element_type=jnp.float32) + b3_ref[i]   # (TB, 2D)

        s = jnp.tanh(st[:, :dim]) * one_m               # s-net has final Tanh
        t = st[:, dim:] * one_m

        # z = (1 - mask) * (z - t) * exp(-s) + z_
        z = one_m * (z - t) * jnp.exp(-s) + z_masked
        # log_R_xz -= s.sum(-1)
        logdet = logdet - jnp.sum(s, axis=-1, keepdims=True)

    z_ref[...] = z
    logdet_ref[...] = logdet


# ----------------------------- parameter fusion -------------------------------

def fuse_params(params, hp, weight_dtype=jnp.bfloat16):
    """Fuse s/t nets per layer; pad hidden lane dim to HP. Do this once per model."""
    L, D, H = params["sW1"].shape
    # Padded hidden lanes [2H, HP) are zero in W1/b1/W2/b2 and the corresponding rows of
    # W2/W3 are zero, so they contribute exactly 0 downstream.  Keep this invariant.
    assert 2 * H <= hp, "HP must cover both s and t hidden widths"
    # NOTE(v6e/v7x): if 2H < 256 each W1/W2 matmul only half-fills the 256-wide MXU;
    # zero-padding HP further does not help — prefer 2H >= 256 when H is tunable.
    f32 = jnp.float32

    W1 = jnp.zeros((L, D, hp), f32)
    W1 = W1.at[:, :, :H].set(params["sW1"]).at[:, :, H:2 * H].set(params["tW1"])
    b1 = jnp.zeros((L, 1, hp), f32)
    b1 = b1.at[:, :, :H].set(params["sb1"]).at[:, :, H:2 * H].set(params["tb1"])

    W2 = jnp.zeros((L, hp, hp), f32)
    W2 = W2.at[:, :H, :H].set(params["sW2"]).at[:, H:2 * H, H:2 * H].set(params["tW2"])
    b2 = jnp.zeros((L, 1, hp), f32)
    b2 = b2.at[:, :, :H].set(params["sb2"]).at[:, :, H:2 * H].set(params["tb2"])

    W3 = jnp.zeros((L, hp, 2 * D), f32)
    W3 = W3.at[:, :H, :D].set(params["sW3"]).at[:, H:2 * H, D:].set(params["tW3"])
    b3 = jnp.zeros((L, 1, 2 * D), f32)
    b3 = b3.at[:, :, :D].set(params["sb3"]).at[:, :, D:].set(params["tb3"])

    mask = params["mask"].astype(f32)                   # (L, 1, D)

    # TODO(synk): if tighter logdet accuracy is needed, keep W3 (feeds tanh->s->logdet)
    # in f32 instead of weight_dtype.
    return {
        "mask": mask,
        "W1": W1.astype(weight_dtype), "b1": b1,
        "W2": W2.astype(weight_dtype), "b2": b2,
        "W3": W3.astype(weight_dtype), "b3": b3,
    }


# ----------------------------- tiling helpers ---------------------------------

def _choose_batch_tile(B, batch_tile):
    """TB multiple of 128 when B >= 128; >= 2 grid steps when B >= 256 (v7x 2 TCs)."""
    if B < 128:
        tb = _round_up(B, 8)
        return tb, tb
    tb = min(_round_up(batch_tile, 128), _round_up(B, 128))
    if B >= 256:
        half = max(128, ((_round_up(B, 128) // 2) // 128) * 128)
        tb = min(tb, half)
    return tb, _round_up(B, tb)


# ----------------------------- wrapper ---------------------------------------

def realnvp_forward(x, params, *, weight_dtype=jnp.bfloat16, batch_tile=512):
    """Returns (z, log_R_xz) — matching RealNVP.forward / RealNVP.f semantics."""
    B, D = x.shape
    L = params["mask"].shape[0]
    H = params["sW1"].shape[2]

    HP = _round_up(2 * H, 128)          # fused (s|t) hidden width, lane-padded
    fused = fuse_params(params, HP, weight_dtype)   # NOTE: fuse once per model in real use

    TB, Bp = _choose_batch_tile(B, batch_tile)

    # Stream x at its natural width; only pad the batch dim (if needed).
    x32 = x.astype(jnp.float32)
    x_in = x32 if Bp == B else jnp.zeros((Bp, D), jnp.float32).at[:B].set(x32)

    weight_args = (fused["mask"], fused["W1"], fused["b1"], fused["W2"],
                   fused["b2"], fused["W3"], fused["b3"])

    have_buffered = hasattr(pl, "Buffered")

    def _resident(a):
        # Full-array block, constant index_map -> stays in VMEM across grid steps.
        idx = lambda b, _nd=a.ndim: (0,) * _nd
        if have_buffered:
            try:
                # Single buffer: no second never-refilled copy of the weights.
                return pl.BlockSpec(a.shape, idx, pipeline_mode=pl.Buffered(1))
            except (TypeError, ValueError):
                pass
        return pl.BlockSpec(a.shape, idx)

    in_specs = [pl.BlockSpec((TB, D), lambda b: (b, 0))] + [_resident(a) for a in weight_args]
    out_specs = (pl.BlockSpec((TB, D), lambda b: (b, 0)),
                 pl.BlockSpec((TB, 1), lambda b: (b, 0)))
    out_shape = (jax.ShapeDtypeStruct((Bp, D), jnp.float32),
                 jax.ShapeDtypeStruct((Bp, 1), jnp.float32))

    weight_bytes = sum(int(a.size) * a.dtype.itemsize for a in weight_args)
    io_bytes = 2 * int(Bp) * D * 4 + int(Bp) * 4
    flops = 2 * Bp * L * (D * HP + HP * HP + HP * 2 * D)
    transcendentals = Bp * L * 2 * D       # tanh + exp per feature per layer
    cost = pl.CostEstimate(flops=int(flops), transcendentals=int(transcendentals),
                           bytes_accessed=int(weight_bytes + io_bytes))

    # VMEM estimate: resident weights (x buffer count) + double-buffered x/z/logdet tiles
    # + working activations.
    wbuf = 1 if have_buffered else 2
    vmem_needed = (wbuf * weight_bytes
                   + 2 * 2 * TB * (D + 1) * 4
                   + TB * (2 * HP + 4 * D) * 4)
    vmem_limit = None
    if vmem_needed > (32 << 20):
        cap = 56 << 20                      # stay below v7x's 64 MiB/TC physical VMEM
        try:
            cap = min(cap, (pltpu.get_tpu_info().vmem_capacity_bytes * 7) // 8)
        except Exception:
            pass
        vmem_limit = min(int(1.25 * vmem_needed), cap)
    # TODO(synk): if resident weights approach the cap, switch to per-layer weight
    # streaming on a trailing "arbitrary" grid axis (see kernel TODO).

    z_pad, ld_pad = pl.pallas_call(
        functools.partial(realnvp_f_kernel, num_layers=L, dim=D),
        out_shape=out_shape,
        grid=(Bp // TB,),
        in_specs=in_specs,
        out_specs=out_specs,
        compiler_params=pltpu.CompilerParams(
            dimension_semantics=("parallel",),
            vmem_limit_bytes=vmem_limit),
        cost_estimate=cost,
    )(x_in, *weight_args)

    return z_pad[:B], ld_pad[:B, 0]


# ----------------------------- parameter setup --------------------------------

def init_params(key, num_layers, dim, hidden):
    """Deterministic init mimicking torch.nn.Linear (U(-1/sqrt(fan_in), +))."""
    ks = jax.random.split(key, 12)

    def lin(k, fan_in, shape):
        bound = 1.0 / jnp.sqrt(fan_in)
        return jax.random.uniform(k, shape, jnp.float32, -bound, bound)

    L, D, H = num_layers, dim, hidden
    params = {
        "sW1": lin(ks[0], D, (L, D, H)), "sb1": lin(ks[1], D, (L, 1, H)),
        "sW2": lin(ks[2], H, (L, H, H)), "sb2": lin(ks[3], H, (L, 1, H)),
        "sW3": lin(ks[4], H, (L, H, D)), "sb3": lin(ks[5], H, (L, 1, D)),
        "tW1": lin(ks[6], D, (L, D, H)), "tb1": lin(ks[7], D, (L, 1, H)),
        "tW2": lin(ks[8], H, (L, H, H)), "tb2": lin(ks[9], H, (L, 1, H)),
        "tW3": lin(ks[10], H, (L, H, D)), "tb3": lin(ks[11], H, (L, 1, D)),
    }
    # Alternating binary masks (checkerboard on features), standard RealNVP setup.
    feat = jnp.arange(D)
    mask = jnp.stack([(feat % 2 == (i % 2)).astype(jnp.float32) for i in range(L)])
    params["mask"] = mask.reshape(L, 1, D)
    return params


# ----------------------------- references -------------------------------------

def realnvp_f_ref(x, p):
    """Pure f32 JAX reference of RealNVP.f on raw (un-fused) params."""
    L = p["mask"].shape[0]
    z = x
    logdet = jnp.zeros((x.shape[0],), jnp.float32)
    for i in reversed(range(L)):
        m = p["mask"][i]
        one_m = 1.0 - m
        z_ = m * z
        h = _leaky_relu(z_ @ p["sW1"][i] + p["sb1"][i])
        h = _leaky_relu(h @ p["sW2"][i] + p["sb2"][i])
        s = jnp.tanh(h @ p["sW3"][i] + p["sb3"][i]) * one_m
        h = _leaky_relu(z_ @ p["tW1"][i] + p["tb1"][i])
        h = _leaky_relu(h @ p["tW2"][i] + p["tb2"][i])
        t = (h @ p["tW3"][i] + p["tb3"][i]) * one_m
        z = one_m * (z - t) * jnp.exp(-s) + z_
        logdet = logdet - jnp.sum(s, axis=-1)
    return z, logdet


def realnvp_f_fused_ref(x, fp, D, L):
    """Pure-JAX mirror of the kernel's fused / bf16-weight math (tight check)."""
    wdt = fp["W1"].dtype
    z = x.astype(jnp.float32)
    logdet = jnp.zeros((x.shape[0],), jnp.float32)
    for i in reversed(range(L)):
        m = fp["mask"][i]
        one_m = 1.0 - m
        zm = m * z
        h = _leaky_relu(jnp.dot(zm.astype(wdt), fp["W1"][i],
                                preferred_element_type=jnp.float32) + fp["b1"][i])
        h = _leaky_relu(jnp.dot(h.astype(wdt), fp["W2"][i],
                                preferred_element_type=jnp.float32) + fp["b2"][i])
        st = jnp.dot(h.astype(wdt), fp["W3"][i],
                     preferred_element_type=jnp.float32) + fp["b3"][i]
        s = jnp.tanh(st[:, :D]) * one_m
        t = st[:, D:] * one_m
        z = one_m * (z - t) * jnp.exp(-s) + zm
        logdet = logdet - jnp.sum(s, axis=-1)
    return z, logdet


# TODO(synk): prior.log_prob / prior.sample_n and system.energy (used by log_prob,
# sample, loss_*) are external callables with no in-kernel equivalent; only the
# forward() / f() hot path is implemented here.

if __name__ == "__main__":
    B, D, H, L = 8, 8, 32, 4   # batch, feature dim, hidden width, #coupling layers

    key = jax.random.PRNGKey(0)
    k_param, k_x = jax.random.split(key)
    params = init_params(k_param, L, D, H)
    x = jax.random.normal(k_x, (B, D), jnp.float32)

    z, log_R_xz = realnvp_forward(x, params)
    jax.block_until_ready((z, log_R_xz))

    # Tight check against a pure-JAX mirror of the fused/bf16 kernel math.
    HP = _round_up(2 * H, 128)
    fused = fuse_params(params, HP)
    z_f, ld_f = realnvp_f_fused_ref(x, fused, D, L)
    assert jnp.allclose(z, z_f, atol=2e-3, rtol=2e-3)
    assert jnp.allclose(log_R_xz, ld_f, atol=2e-3, rtol=2e-3)

    # Loose check against the full-f32 raw-parameter reference (bf16 weight rounding).
    z_ref, ld_ref = realnvp_f_ref(x, params)
    assert jnp.allclose(z, z_ref, atol=2e-1, rtol=2e-1)
    assert jnp.allclose(log_R_xz, ld_ref, atol=2e-1, rtol=2e-1)

    print("KERNEL_OK")
</pallas_src>

<mosaic_0001>
module attributes {stable_mosaic.version = 11 : i64} {
  func.func @realnvp_f_kernel(%arg0: i32, %arg1: memref<8x8xf32, #tpu.memory_space<vmem>>, %arg2: memref<4x1x8xf32, #tpu.memory_space<vmem>>, %arg3: memref<4x8x128xbf16, #tpu.memory_space<vmem>>, %arg4: memref<4x1x128xf32, #tpu.memory_space<vmem>>, %arg5: memref<4x128x128xbf16, #tpu.memory_space<vmem>>, %arg6: memref<4x1x128xf32, #tpu.memory_space<vmem>>, %arg7: memref<4x128x16xbf16, #tpu.memory_space<vmem>>, %arg8: memref<4x1x16xf32, #tpu.memory_space<vmem>>, %arg9: memref<8x8xf32, #tpu.memory_space<vmem>>, %arg10: memref<8x1xf32, #tpu.memory_space<vmem>>) attributes {dimension_semantics = [#tpu.dimension_semantics<parallel>], iteration_bounds = array<i64: 1>, scalar_prefetch = 0 : i64, scratch_operands = 0 : i64, tpu.core_type = #tpu.core_type<tc>, window_params = [{transform_indices = @transform_0, window_bounds = array<i64: 8, 8>}, {pipeline_mode = #tpu.pipeline_mode<synchronous>, transform_indices = @transform_1, window_bounds = array<i64: 4, 1, 8>}, {pipeline_mode = #tpu.pipeline_mode<synchronous>, transform_indices = @transform_2, window_bounds = array<i64: 4, 8, 128>}, {pipeline_mode = #tpu.pipeline_mode<synchronous>, transform_indices = @transform_3, window_bounds = array<i64: 4, 1, 128>}, {pipeline_mode = #tpu.pipeline_mode<synchronous>, transform_indices = @transform_4, window_bounds = array<i64: 4, 128, 128>}, {pipeline_mode = #tpu.pipeline_mode<synchronous>, transform_indices = @transform_5, window_bounds = array<i64: 4, 1, 128>}, {pipeline_mode = #tpu.pipeline_mode<synchronous>, transform_indices = @transform_6, window_bounds = array<i64: 4, 128, 16>}, {pipeline_mode = #tpu.pipeline_mode<synchronous>, transform_indices = @transform_7, window_bounds = array<i64: 4, 1, 16>}, {transform_indices = @transform_8, window_bounds = array<i64: 8, 8>}, {transform_indices = @transform_9, window_bounds = array<i64: 8, 1>}]} {
    %c0 = arith.constant 0 : index
    %c0_0 = arith.constant 0 : index
    %0 = vector.load %arg1[%c0, %c0_0] : memref<8x8xf32, #tpu.memory_space<vmem>>, vector<8x8xf32>
    %cst = arith.constant 0.000000e+00 : f32
    %1 = vector.broadcast %cst : f32 to vector<8x1xf32>
    %c3 = arith.constant 3 : index
    %c0_1 = arith.constant 0 : index
    %c0_2 = arith.constant 0 : index
    %2 = vector.load %arg2[%c3, %c0_1, %c0_2] : memref<4x1x8xf32, #tpu.memory_space<vmem>>, vector<1x1x8xf32>
    %3 = vector.shape_cast %2 : vector<1x1x8xf32> to vector<1x8xf32>
    %cst_3 = arith.constant 1.000000e+00 : f32
    %4 = vector.broadcast %cst_3 : f32 to vector<1x8xf32>
    %5 = arith.subf %4, %3 : vector<1x8xf32>
    %6 = vector.broadcast %3 : vector<1x8xf32> to vector<8x8xf32>
    %7 = arith.mulf %6, %0 : vector<8x8xf32>
    %8 = arith.truncf %7 : vector<8x8xf32> to vector<8x8xbf16>
    %c3_4 = arith.constant 3 : index
    %c0_5 = arith.constant 0 : index
    %c0_6 = arith.constant 0 : index
    %9 = vector.load %arg3[%c3_4, %c0_5, %c0_6] : memref<4x8x128xbf16, #tpu.memory_space<vmem>>, vector<1x8x128xbf16>
    %10 = vector.shape_cast %9 : vector<1x8x128xbf16> to vector<8x128xbf16>
    %cst_7 = arith.constant dense<0.000000e+00> : vector<8x128xf32>
    %11 = tpu.matmul %8, %10, %cst_7 {dimension_numbers = #tpu.dot_dimension_numbers<[1], [0], [0], [1], [0, 0, 1, 1], [], []>} : vector<8x8xbf16>, vector<8x128xbf16>, vector<8x128xf32> -> vector<8x128xf32>
    %c3_8 = arith.constant 3 : index
    %c0_9 = arith.constant 0 : index
    %c0_10 = arith.constant 0 : index
    %12 = vector.load %arg4[%c3_8, %c0_9, %c0_10] : memref<4x1x128xf32, #tpu.memory_space<vmem>>, vector<1x1x128xf32>
    %13 = vector.shape_cast %12 : vector<1x1x128xf32> to vector<1x128xf32>
    %14 = vector.broadcast %13 : vector<1x128xf32> to vector<8x128xf32>
    %15 = arith.addf %11, %14 : vector<8x128xf32>
    %cst_11 = arith.constant 0.000000e+00 : f32
    %16 = vector.broadcast %cst_11 : f32 to vector<8x128xf32>
    %17 = arith.cmpf oge, %15, %16 : vector<8x128xf32>
    %cst_12 = arith.constant 0.00999999977 : f32
    %18 = vector.broadcast %cst_12 : f32 to vector<8x128xf32>
    %19 = arith.mulf %18, %15 : vector<8x128xf32>
    %20 = arith.select %17, %15, %19 : vector<8x128xi1>, vector<8x128xf32>
    %21 = arith.truncf %20 : vector<8x128xf32> to vector<8x128xbf16>
    %c3_13 = arith.constant 3 : index
    %c0_14 = arith.constant 0 : index
    %c0_15 = arith.constant 0 : index
    %22 = vector.load %arg5[%c3_13, %c0_14, %c0_15] : memref<4x128x128xbf16, #tpu.memory_space<vmem>>, vector<1x128x128xbf16>
    %23 = vector.shape_cast %22 : vector<1x128x128xbf16> to vector<128x128xbf16>
    %cst_16 = arith.constant dense<0.000000e+00> : vector<8x128xf32>
    %24 = tpu.matmul %21, %23, %cst_16 {dimension_numbers = #tpu.dot_dimension_numbers<[1], [0], [0], [1], [0, 0, 1, 1], [], []>} : vector<8x128xbf16>, vector<128x128xbf16>, vector<8x128xf32> -> vector<8x128xf32>
    %c3_17 = arith.constant 3 : index
    %c0_18 = arith.constant 0 : index
    %c0_19 = arith.constant 0 : index
    %25 = vector.load %arg6[%c3_17, %c0_18, %c0_19] : memref<4x1x128xf32, #tpu.memory_space<vmem>>, vector<1x1x128xf32>
    %26 = vector.shape_cast %25 : vector<1x1x128xf32> to vector<1x128xf32>
    %27 = vector.broadcast %26 : vector<1x128xf32> to vector<8x128xf32>
    %28 = arith.addf %24, %27 : vector<8x128xf32>
    %cst_20 = arith.constant 0.000000e+00 : f32
    %29 = vector.broadcast %cst_20 : f32 to vector<8x128xf32>
    %30 = arith.cmpf oge, %28, %29 : vector<8x128xf32>
    %cst_21 = arith.constant 0.00999999977 : f32
    %31 = vector.broadcast %cst_21 : f32 to vector<8x128xf32>
    %32 = arith.mulf %31, %28 : vector<8x128xf32>
    %33 = arith.select %30, %28, %32 : vector<8x128xi1>, vector<8x128xf32>
    %34 = arith.truncf %33 : vector<8x128xf32> to vector<8x128xbf16>
    %c3_22 = arith.constant 3 : index
    %c0_23 = arith.constant 0 : index
    %c0_24 = arith.constant 0 : index
    %35 = vector.load %arg7[%c3_22, %c0_23, %c0_24] : memref<4x128x16xbf16, #tpu.memory_space<vmem>>, vector<1x128x16xbf16>
    %36 = vector.shape_cast %35 : vector<1x128x16xbf16> to vector<128x16xbf16>
    %cst_25 = arith.constant dense<0.000000e+00> : vector<8x16xf32>
    %37 = tpu.matmul %34, %36, %cst_25 {dimension_numbers = #tpu.dot_dimension_numbers<[1], [0], [0], [1], [0, 0, 1, 1], [], []>} : vector<8x128xbf16>, vector<128x16xbf16>, vector<8x16xf32> -> vector<8x16xf32>
    %c3_26 = arith.constant 3 : index
    %c0_27 = arith.constant 0 : index
    %c0_28 = arith.constant 0 : index
    %38 = vector.load %arg8[%c3_26, %c0_27, %c0_28] : memref<4x1x16xf32, #tpu.memory_space<vmem>>, vector<1x1x16xf32>
    %39 = vector.shape_cast %38 : vector<1x1x16xf32> to vector<1x16xf32>
    %40 = vector.broadcast %39 : vector<1x16xf32> to vector<8x16xf32>
    %41 = arith.addf %37, %40 : vector<8x16xf32>
    %42 = vector.extract_strided_slice %41 {offsets = [0, 0], sizes = [8, 8], strides = [1, 1]} : vector<8x16xf32> to vector<8x8xf32>
    %43 = math.tanh %42 : vector<8x8xf32>
    %44 = vector.broadcast %5 : vector<1x8xf32> to vector<8x8xf32>
    %45 = arith.mulf %43, %44 : vector<8x8xf32>
    %46 = vector.extract_strided_slice %41 {offsets = [0, 8], sizes = [8, 8], strides = [1, 1]} : vector<8x16xf32> to vector<8x8xf32>
    %47 = vector.broadcast %5 : vector<1x8xf32> to vector<8x8xf32>
    %48 = arith.mulf %46, %47 : vector<8x8xf32>
    %49 = arith.subf %0, %48 : vector<8x8xf32>
    %50 = vector.broadcast %5 : vector<1x8xf32> to vector<8x8xf32>
    %51 = arith.mulf %50, %49 : vector<8x8xf32>
    %cst_29 = arith.constant 0.000000e+00 : f32
    %52 = vector.broadcast %cst_29 : f32 to vector<8x8xf32>
    %53 = arith.subf %52, %45 : vector<8x8xf32>
    %54 = math.exp %53 : vector<8x8xf32>
    %55 = arith.mulf %51, %54 : vector<8x8xf32>
    %56 = arith.addf %55, %7 : vector<8x8xf32>
    %cst_30 = arith.constant dense<0.000000e+00> : vector<8xf32>
    %57 = vector.multi_reduction <add>, %45, %cst_30 [1] : vector<8x8xf32> to vector<8xf32>
    %58 = vector.shape_cast %57 : vector<8xf32> to vector<8x1xf32>
    %59 = arith.subf %1, %58 : vector<8x1xf32>
    %c2 = arith.constant 2 : index
    %c0_31 = arith.constant 0 : index
    %c0_32 = arith.constant 0 : index
    %60 = vector.load %arg2[%c2, %c0_31, %c0_32] : memref<4x1x8xf32, #tpu.memory_space<vmem>>, vector<1x1x8xf32>
    %61 = vector.shape_cast %60 : vector<1x1x8xf32> to vector<1x8xf32>
    %cst_33 = arith.constant 1.000000e+00 : f32
    %62 = vector.broadcast %cst_33 : f32 to vector<1x8xf32>
    %63 = arith.subf %62, %61 : vector<1x8xf32>
    %64 = vector.broadcast %61 : vector<1x8xf32> to vector<8x8xf32>
    %65 = arith.mulf %64, %56 : vector<8x8xf32>
    %66 = arith.truncf %65 : vector<8x8xf32> to vector<8x8xbf16>
    %c2_34 = arith.constant 2 : index
    %c0_35 = arith.constant 0 : index
    %c0_36 = arith.constant 0 : index
    %67 = vector.load %arg3[%c2_34, %c0_35, %c0_36] : memref<4x8x128xbf16, #tpu.memory_space<vmem>>, vector<1x8x128xbf16>
    %68 = vector.shape_cast %67 : vector<1x8x128xbf16> to vector<8x128xbf16>
    %cst_37 = arith.constant dense<0.000000e+00> : vector<8x128xf32>
    %69 = tpu.matmul %66, %68, %cst_37 {dimension_numbers = #tpu.dot_dimension_numbers<[1], [0], [0], [1], [0, 0, 1, 1], [], []>} : vector<8x8xbf16>, vector<8x128xbf16>, vector<8x128xf32> -> vector<8x128xf32>
    %c2_38 = arith.constant 2 : index
    %c0_39 = arith.constant 0 : index
    %c0_40 = arith.constant 0 : index
    %70 = vector.load %arg4[%c2_38, %c0_39, %c0_40] : memref<4x1x128xf32, #tpu.memory_space<vmem>>, vector<1x1x128xf32>
    %71 = vector.shape_cast %70 : vector<1x1x128xf32> to vector<1x128xf32>
    %72 = vector.broadcast %71 : vector<1x128xf32> to vector<8x128xf32>
    %73 = arith.addf %69, %72 : vector<8x128xf32>
    %cst_41 = arith.constant 0.000000e+00 : f32
    %74 = vector.broadcast %cst_41 : f32 to vector<8x128xf32>
    %75 = arith.cmpf oge, %73, %74 : vector<8x128xf32>
    %cst_42 = arith.constant 0.00999999977 : f32
    %76 = vector.broadcast %cst_42 : f32 to vector<8x128xf32>
    %77 = arith.mulf %76, %73 : vector<8x128xf32>
    %78 = arith.select %75, %73, %77 : vector<8x128xi1>, vector<8x128xf32>
    %79 = arith.truncf %78 : vector<8x128xf32> to vector<8x128xbf16>
    %c2_43 = arith.constant 2 : index
    %c0_44 = arith.constant 0 : index
    %c0_45 = arith.constant 0 : index
    %80 = vector.load %arg5[%c2_43, %c0_44, %c0_45] : memref<4x128x128xbf16, #tpu.memory_space<vmem>>, vector<1x128x128xbf16>
    %81 = vector.shape_cast %80 : vector<1x128x128xbf16> to vector<128x128xbf16>
    %cst_46 = arith.constant dense<0.000000e+00> : vector<8x128xf32>
    %82 = tpu.matmul %79, %81, %cst_46 {dimension_numbers = #tpu.dot_dimension_numbers<[1], [0], [0], [1], [0, 0, 1, 1], [], []>} : vector<8x128xbf16>, vector<128x128xbf16>, vector<8x128xf32> -> vector<8x128xf32>
    %c2_47 = arith.constant 2 : index
    %c0_48 = arith.constant 0 : index
    %c0_49 = arith.constant 0 : index
    %83 = vector.load %arg6[%c2_47, %c0_48, %c0_49] : memref<4x1x128xf32, #tpu.memory_space<vmem>>, vector<1x1x128xf32>
    %84 = vector.shape_cast %83 : vector<1x1x128xf32> to vector<1x128xf32>
    %85 = vector.broadcast %84 : vector<1x128xf32> to vector<8x128xf32>
    %86 = arith.addf %82, %85 : vector<8x128xf32>
    %cst_50 = arith.constant 0.000000e+00 : f32
    %87 = vector.broadcast %cst_50 : f32 to vector<8x128xf32>
    %88 = arith.cmpf oge, %86, %87 : vector<8x128xf32>
    %cst_51 = arith.constant 0.00999999977 : f32
    %89 = vector.broadcast %cst_51 : f32 to vector<8x128xf32>
    %90 = arith.mulf %89, %86 : vector<8x128xf32>
    %91 = arith.select %88, %86, %90 : vector<8x128xi1>, vector<8x128xf32>
    %92 = arith.truncf %91 : vector<8x128xf32> to vector<8x128xbf16>
    %c2_52 = arith.constant 2 : index
    %c0_53 = arith.constant 0 : index
    %c0_54 = arith.constant 0 : index
    %93 = vector.load %arg7[%c2_52, %c0_53, %c0_54] : memref<4x128x16xbf16, #tpu.memory_space<vmem>>, vector<1x128x16xbf16>
    %94 = vector.shape_cast %93 : vector<1x128x16xbf16> to vector<128x16xbf16>
    %cst_55 = arith.constant dense<0.000000e+00> : vector<8x16xf32>
    %95 = tpu.matmul %92, %94, %cst_55 {dimension_numbers = #tpu.dot_dimension_numbers<[1], [0], [0], [1], [0, 0, 1, 1], [], []>} : vector<8x128xbf16>, vector<128x16xbf16>, vector<8x16xf32> -> vector<8x16xf32>
    %c2_56 = arith.constant 2 : index
    %c0_57 = arith.constant 0 : index
    %c0_58 = arith.constant 0 : index
    %96 = vector.load %arg8[%c2_56, %c0_57, %c0_58] : memref<4x1x16xf32, #tpu.memory_space<vmem>>, vector<1x1x16xf32>
    %97 = vector.shape_cast %96 : vector<1x1x16xf32> to vector<1x16xf32>
    %98 = vector.broadcast %97 : vector<1x16xf32> to vector<8x16xf32>
    %99 = arith.addf %95, %98 : vector<8x16xf32>
    %100 = vector.extract_strided_slice %99 {offsets = [0, 0], sizes = [8, 8], strides = [1, 1]} : vector<8x16xf32> to vector<8x8xf32>
    %101 = math.tanh %100 : vector<8x8xf32>
    %102 = vector.broadcast %63 : vector<1x8xf32> to vector<8x8xf32>
    %103 = arith.mulf %101, %102 : vector<8x8xf32>
    %104 = vector.extract_strided_slice %99 {offsets = [0, 8], sizes = [8, 8], strides = [1, 1]} : vector<8x16xf32> to vector<8x8xf32>
    %105 = vector.broadcast %63 : vector<1x8xf32> to vector<8x8xf32>
    %106 = arith.mulf %104, %105 : vector<8x8xf32>
    %107 = arith.subf %56, %106 : vector<8x8xf32>
    %108 = vector.broadcast %63 : vector<1x8xf32> to vector<8x8xf32>
    %109 = arith.mulf %108, %107 : vector<8x8xf32>
    %cst_59 = arith.constant 0.000000e+00 : f32
    %110 = vector.broadcast %cst_59 : f32 to vector<8x8xf32>
    %111 = arith.subf %110, %103 : vector<8x8xf32>
    %112 = math.exp %111 : vector<8x8xf32>
    %113 = arith.mulf %109, %112 : vector<8x8xf32>
    %114 = arith.addf %113, %65 : vector<8x8xf32>
    %cst_60 = arith.constant dense<0.000000e+00> : vector<8xf32>
    %115 = vector.multi_reduction <add>, %103, %cst_60 [1] : vector<8x8xf32> to vector<8xf32>
    %116 = vector.shape_cast %115 : vector<8xf32> to vector<8x1xf32>
    %117 = arith.subf %59, %116 : vector<8x1xf32>
    %c1 = arith.constant 1 : index
    %c0_61 = arith.constant 0 : index
    %c0_62 = arith.constant 0 : index
    %118 = vector.load %arg2[%c1, %c0_61, %c0_62] : memref<4x1x8xf32, #tpu.memory_space<vmem>>, vector<1x1x8xf32>
    %119 = vector.shape_cast %118 : vector<1x1x8xf32> to vector<1x8xf32>
    %cst_63 = arith.constant 1.000000e+00 : f32
    %120 = vector.broadcast %cst_63 : f32 to vector<1x8xf32>
    %121 = arith.subf %120, %119 : vector<1x8xf32>
    %122 = vector.broadcast %119 : vector<1x8xf32> to vector<8x8xf32>
    %123 = arith.mulf %122, %114 : vector<8x8xf32>
    %124 = arith.truncf %123 : vector<8x8xf32> to vector<8x8xbf16>
    %c1_64 = arith.constant 1 : index
    %c0_65 = arith.constant 0 : index
    %c0_66 = arith.constant 0 : index
    %125 = vector.load %arg3[%c1_64, %c0_65, %c0_66] : memref<4x8x128xbf16, #tpu.memory_space<vmem>>, vector<1x8x128xbf16>
    %126 = vector.shape_cast %125 : vector<1x8x128xbf16> to vector<8x128xbf16>
    %cst_67 = arith.constant dense<0.000000e+00> : vector<8x128xf32>
    %127 = tpu.matmul %124, %126, %cst_67 {dimension_numbers = #tpu.dot_dimension_numbers<[1], [0], [0], [1], [0, 0, 1, 1], [], []>} : vector<8x8xbf16>, vector<8x128xbf16>, vector<8x128xf32> -> vector<8x128xf32>
    %c1_68 = arith.constant 1 : index
    %c0_69 = arith.constant 0 : index
    %c0_70 = arith.constant 0 : index
    %128 = vector.load %arg4[%c1_68, %c0_69, %c0_70] : memref<4x1x128xf32, #tpu.memory_space<vmem>>, vector<1x1x128xf32>
    %129 = vector.shape_cast %128 : vector<1x1x128xf32> to vector<1x128xf32>
    %130 = vector.broadcast %129 : vector<1x128xf32> to vector<8x128xf32>
    %131 = arith.addf %127, %130 : vector<8x128xf32>
    %cst_71 = arith.constant 0.000000e+00 : f32
    %132 = vector.broadcast %cst_71 : f32 to vector<8x128xf32>
    %133 = arith.cmpf oge, %131, %132 : vector<8x128xf32>
    %cst_72 = arith.constant 0.00999999977 : f32
    %134 = vector.broadcast %cst_72 : f32 to vector<8x128xf32>
    %135 = arith.mulf %134, %131 : vector<8x128xf32>
    %136 = arith.select %133, %131, %135 : vector<8x128xi1>, vector<8x128xf32>
    %137 = arith.truncf %136 : vector<8x128xf32> to vector<8x128xbf16>
    %c1_73 = arith.constant 1 : index
    %c0_74 = arith.constant 0 : index
    %c0_75 = arith.constant 0 : index
    %138 = vector.load %arg5[%c1_73, %c0_74, %c0_75] : memref<4x128x128xbf16, #tpu.memory_space<vmem>>, vector<1x128x128xbf16>
    %139 = vector.shape_cast %138 : vector<1x128x128xbf16> to vector<128x128xbf16>
    %cst_76 = arith.constant dense<0.000000e+00> : vector<8x128xf32>
    %140 = tpu.matmul %137, %139, %cst_76 {dimension_numbers = #tpu.dot_dimension_numbers<[1], [0], [0], [1], [0, 0, 1, 1], [], []>} : vector<8x128xbf16>, vector<128x128xbf16>, vector<8x128xf32> -> vector<8x128xf32>
    %c1_77 = arith.constant 1 : index
    %c0_78 = arith.constant 0 : index
    %c0_79 = arith.constant 0 : index
    %141 = vector.load %arg6[%c1_77, %c0_78, %c0_79] : memref<4x1x128xf32, #tpu.memory_space<vmem>>, vector<1x1x128xf32>
    %142 = vector.shape_cast %141 : vector<1x1x128xf32> to vector<1x128xf32>
    %143 = vector.broadcast %142 : vector<1x128xf32> to vector<8x128xf32>
    %144 = arith.addf %140, %143 : vector<8x128xf32>
    %cst_80 = arith.constant 0.000000e+00 : f32
    %145 = vector.broadcast %cst_80 : f32 to vector<8x128xf32>
    %146 = arith.cmpf oge, %144, %145 : vector<8x128xf32>
    %cst_81 = arith.constant 0.00999999977 : f32
    %147 = vector.broadcast %cst_81 : f32 to vector<8x128xf32>
    %148 = arith.mulf %147, %144 : vector<8x128xf32>
    %149 = arith.select %146, %144, %148 : vector<8x128xi1>, vector<8x128xf32>
    %150 = arith.truncf %149 : vector<8x128xf32> to vector<8x128xbf16>
    %c1_82 = arith.constant 1 : index
    %c0_83 = arith.constant 0 : index
    %c0_84 = arith.constant 0 : index
    %151 = vector.load %arg7[%c1_82, %c0_83, %c0_84] : memref<4x128x16xbf16, #tpu.memory_space<vmem>>, vector<1x128x16xbf16>
    %152 = vector.shape_cast %151 : vector<1x128x16xbf16> to vector<128x16xbf16>
    %cst_85 = arith.constant dense<0.000000e+00> : vector<8x16xf32>
    %153 = tpu.matmul %150, %152, %cst_85 {dimension_numbers = #tpu.dot_dimension_numbers<[1], [0], [0], [1], [0, 0, 1, 1], [], []>} : vector<8x128xbf16>, vector<128x16xbf16>, vector<8x16xf32> -> vector<8x16xf32>
    %c1_86 = arith.constant 1 : index
    %c0_87 = arith.constant 0 : index
    %c0_88 = arith.constant 0 : index
    %154 = vector.load %arg8[%c1_86, %c0_87, %c0_88] : memref<4x1x16xf32, #tpu.memory_space<vmem>>, vector<1x1x16xf32>
    %155 = vector.shape_cast %154 : vector<1x1x16xf32> to vector<1x16xf32>
    %156 = vector.broadcast %155 : vector<1x16xf32> to vector<8x16xf32>
    %157 = arith.addf %153, %156 : vector<8x16xf32>
    %158 = vector.extract_strided_slice %157 {offsets = [0, 0], sizes = [8, 8], strides = [1, 1]} : vector<8x16xf32> to vector<8x8xf32>
    %159 = math.tanh %158 : vector<8x8xf32>
    %160 = vector.broadcast %121 : vector<1x8xf32> to vector<8x8xf32>
    %161 = arith.mulf %159, %160 : vector<8x8xf32>
    %162 = vector.extract_strided_slice %157 {offsets = [0, 8], sizes = [8, 8], strides = [1, 1]} : vector<8x16xf32> to vector<8x8xf32>
    %163 = vector.broadcast %121 : vector<1x8xf32> to vector<8x8xf32>
    %164 = arith.mulf %162, %163 : vector<8x8xf32>
    %165 = arith.subf %114, %164 : vector<8x8xf32>
    %166 = vector.broadcast %121 : vector<1x8xf32> to vector<8x8xf32>
    %167 = arith.mulf %166, %165 : vector<8x8xf32>
    %cst_89 = arith.constant 0.000000e+00 : f32
    %168 = vector.broadcast %cst_89 : f32 to vector<8x8xf32>
    %169 = arith.subf %168, %161 : vector<8x8xf32>
    %170 = math.exp %169 : vector<8x8xf32>
    %171 = arith.mulf %167, %170 : vector<8x8xf32>
    %172 = arith.addf %171, %123 : vector<8x8xf32>
    %cst_90 = arith.constant dense<0.000000e+00> : vector<8xf32>
    %173 = vector.multi_reduction <add>, %161, %cst_90 [1] : vector<8x8xf32> to vector<8xf32>
    %174 = vector.shape_cast %173 : vector<8xf32> to vector<8x1xf32>
    %175 = arith.subf %117, %174 : vector<8x1xf32>
    %c0_91 = arith.constant 0 : index
    %c0_92 = arith.constant 0 : index
    %c0_93 = arith.constant 0 : index
    %176 = vector.load %arg2[%c0_91, %c0_92, %c0_93] : memref<4x1x8xf32, #tpu.memory_space<vmem>>, vector<1x1x8xf32>
    %177 = vector.shape_cast %176 : vector<1x1x8xf32> to vector<1x8xf32>
    %cst_94 = arith.constant 1.000000e+00 : f32
    %178 = vector.broadcast %cst_94 : f32 to vector<1x8xf32>
    %179 = arith.subf %178, %177 : vector<1x8xf32>
    %180 = vector.broadcast %177 : vector<1x8xf32> to vector<8x8xf32>
    %181 = arith.mulf %180, %172 : vector<8x8xf32>
    %182 = arith.truncf %181 : vector<8x8xf32> to vector<8x8xbf16>
    %c0_95 = arith.constant 0 : index
    %c0_96 = arith.constant 0 : index
    %c0_97 = arith.constant 0 : index
    %183 = vector.load %arg3[%c0_95, %c0_96, %c0_97] : memref<4x8x128xbf16, #tpu.memory_space<vmem>>, vector<1x8x128xbf16>
    %184 = vector.shape_cast %183 : vector<1x8x128xbf16> to vector<8x128xbf16>
    %cst_98 = arith.constant dense<0.000000e+00> : vector<8x128xf32>
    %185 = tpu.matmul %182, %184, %cst_98 {dimension_numbers = #tpu.dot_dimension_numbers<[1], [0], [0], [1], [0, 0, 1, 1], [], []>} : vector<8x8xbf16>, vector<8x128xbf16>, vector<8x128xf32> -> vector<8x128xf32>
    %c0_99 = arith.constant 0 : index
    %c0_100 = arith.constant 0 : index
    %c0_101 = arith.constant 0 : index
    %186 = vector.load %arg4[%c0_99, %c0_100, %c0_101] : memref<4x1x128xf32, #tpu.memory_space<vmem>>, vector<1x1x128xf32>
    %187 = vector.shape_cast %186 : vector<1x1x128xf32> to vector<1x128xf32>
    %188 = vector.broadcast %187 : vector<1x128xf32> to vector<8x128xf32>
    %189 = arith.addf %185, %188 : vector<8x128xf32>
    %cst_102 = arith.constant 0.000000e+00 : f32
    %190 = vector.broadcast %cst_102 : f32 to vector<8x128xf32>
    %191 = arith.cmpf oge, %189, %190 : vector<8x128xf32>
    %cst_103 = arith.constant 0.00999999977 : f32
    %192 = vector.broadcast %cst_103 : f32 to vector<8x128xf32>
    %193 = arith.mulf %192, %189 : vector<8x128xf32>
    %194 = arith.select %191, %189, %193 : vector<8x128xi1>, vector<8x128xf32>
    %195 = arith.truncf %194 : vector<8x128xf32> to vector<8x128xbf16>
    %c0_104 = arith.constant 0 : index
    %c0_105 = arith.constant 0 : index
    %c0_106 = arith.constant 0 : index
    %196 = vector.load %arg5[%c0_104, %c0_105, %c0_106] : memref<4x128x128xbf16, #tpu.memory_space<vmem>>, vector<1x128x128xbf16>
    %197 = vector.shape_cast %196 : vector<1x128x128xbf16> to vector<128x128xbf16>
    %cst_107 = arith.constant dense<0.000000e+00> : vector<8x128xf32>
    %198 = tpu.matmul %195, %197, %cst_107 {dimension_numbers = #tpu.dot_dimension_numbers<[1], [0], [0], [1], [0, 0, 1, 1], [], []>} : vector<8x128xbf16>, vector<128x128xbf16>, vector<8x128xf32> -> vector<8x128xf32>
    %c0_108 = arith.constant 0 : index
    %c0_109 = arith.constant 0 : index
    %c0_110 = arith.constant 0 : index
    %199 = vector.load %arg6[%c0_108, %c0_109, %c0_110] : memref<4x1x128xf32, #tpu.memory_space<vmem>>, vector<1x1x128xf32>
    %200 = vector.shape_cast %199 : vector<1x1x128xf32> to vector<1x128xf32>
    %201 = vector.broadcast %200 : vector<1x128xf32> to vector<8x128xf32>
    %202 = arith.addf %198, %201 : vector<8x128xf32>
    %cst_111 = arith.constant 0.000000e+00 : f32
    %203 = vector.broadcast %cst_111 : f32 to vector<8x128xf32>
    %204 = arith.cmpf oge, %202, %203 : vector<8x128xf32>
    %cst_112 = arith.constant 0.00999999977 : f32
    %205 = vector.broadcast %cst_112 : f32 to vector<8x128xf32>
    %206 = arith.mulf %205, %202 : vector<8x128xf32>
    %207 = arith.select %204, %202, %206 : vector<8x128xi1>, vector<8x128xf32>
    %208 = arith.truncf %207 : vector<8x128xf32> to vector<8x128xbf16>
    %c0_113 = arith.constant 0 : index
    %c0_114 = arith.constant 0 : index
    %c0_115 = arith.constant 0 : index
    %209 = vector.load %arg7[%c0_113, %c0_114, %c0_115] : memref<4x128x16xbf16, #tpu.memory_space<vmem>>, vector<1x128x16xbf16>
    %210 = vector.shape_cast %209 : vector<1x128x16xbf16> to vector<128x16xbf16>
    %cst_116 = arith.constant dense<0.000000e+00> : vector<8x16xf32>
    %211 = tpu.matmul %208, %210, %cst_116 {dimension_numbers = #tpu.dot_dimension_numbers<[1], [0], [0], [1], [0, 0, 1, 1], [], []>} : vector<8x128xbf16>, vector<128x16xbf16>, vector<8x16xf32> -> vector<8x16xf32>
    %c0_117 = arith.constant 0 : index
    %c0_118 = arith.constant 0 : index
    %c0_119 = arith.constant 0 : index
    %212 = vector.load %arg8[%c0_117, %c0_118, %c0_119] : memref<4x1x16xf32, #tpu.memory_space<vmem>>, vector<1x1x16xf32>
    %213 = vector.shape_cast %212 : vector<1x1x16xf32> to vector<1x16xf32>
    %214 = vector.broadcast %213 : vector<1x16xf32> to vector<8x16xf32>
    %215 = arith.addf %211, %214 : vector<8x16xf32>
    %216 = vector.extract_strided_slice %215 {offsets = [0, 0], sizes = [8, 8], strides = [1, 1]} : vector<8x16xf32> to vector<8x8xf32>
    %217 = math.tanh %216 : vector<8x8xf32>
    %218 = vector.broadcast %179 : vector<1x8xf32> to vector<8x8xf32>
    %219 = arith.mulf %217, %218 : vector<8x8xf32>
    %220 = vector.extract_strided_slice %215 {offsets = [0, 8], sizes = [8, 8], strides = [1, 1]} : vector<8x16xf32> to vector<8x8xf32>
    %221 = vector.broadcast %179 : vector<1x8xf32> to vector<8x8xf32>
    %222 = arith.mulf %220, %221 : vector<8x8xf32>
    %223 = arith.subf %172, %222 : vector<8x8xf32>
    %224 = vector.broadcast %179 : vector<1x8xf32> to vector<8x8xf32>
    %225 = arith.mulf %224, %223 : vector<8x8xf32>
    %cst_120 = arith.constant 0.000000e+00 : f32
    %226 = vector.broadcast %cst_120 : f32 to vector<8x8xf32>
    %227 = arith.subf %226, %219 : vector<8x8xf32>
    %228 = math.exp %227 : vector<8x8xf32>
    %229 = arith.mulf %225, %228 : vector<8x8xf32>
    %230 = arith.addf %229, %181 : vector<8x8xf32>
    %cst_121 = arith.constant dense<0.000000e+00> : vector<8xf32>
    %231 = vector.multi_reduction <add>, %219, %cst_121 [1] : vector<8x8xf32> to vector<8xf32>
    %232 = vector.shape_cast %231 : vector<8xf32> to vector<8x1xf32>
    %233 = arith.subf %175, %232 : vector<8x1xf32>
    %c0_122 = arith.constant 0 : index
    %c0_123 = arith.constant 0 : index
    %234 = vector.load %arg9[%c0_122, %c0_123] : memref<8x8xf32, #tpu.memory_space<vmem>>, vector<8x8xf32>
    tpu.vector_store %arg9[%c0_122, %c0_123], %230 {strides = array<i32>} : memref<8x8xf32, #tpu.memory_space<vmem>>, vector<8x8xf32>,
    %c0_124 = arith.constant 0 : index
    %c0_125 = arith.constant 0 : index
    %235 = vector.load %arg10[%c0_124, %c0_125] : memref<8x1xf32, #tpu.memory_space<vmem>>, vector<8x1xf32>
    tpu.vector_store %arg10[%c0_124, %c0_125], %233 {strides = array<i32>} : memref<8x1xf32, #tpu.memory_space<vmem>>, vector<8x1xf32>,
    return
  }
  func.func @transform_0(%arg0: i32) -> (i32, i32) {
    %c0_i32 = arith.constant 0 : i32
    %c0_i32_0 = arith.constant 0 : i32
    return %arg0, %c0_i32 : i32, i32
  }
  func.func @transform_1(%arg0: i32) -> (i32, i32, i32) {
    %c0_i32 = arith.constant 0 : i32
    %c0_i32_0 = arith.constant 0 : i32
    %c0_i32_1 = arith.constant 0 : i32
    %c0_i32_2 = arith.constant 0 : i32
    return %c0_i32, %c0_i32_0, %c0_i32_1 : i32, i32, i32
  }
  func.func @transform_2(%arg0: i32) -> (i32, i32, i32) {
    %c0_i32 = arith.constant 0 : i32
    %c0_i32_0 = arith.constant 0 : i32
    %c0_i32_1 = arith.constant 0 : i32
    %c0_i32_2 = arith.constant 0 : i32
    return %c0_i32, %c0_i32_0, %c0_i32_1 : i32, i32, i32
  }
  func.func @transform_3(%arg0: i32) -> (i32, i32, i32) {
    %c0_i32 = arith.constant 0 : i32
    %c0_i32_0 = arith.constant 0 : i32
    %c0_i32_1 = arith.constant 0 : i32
    %c0_i32_2 = arith.constant 0 : i32
    return %c0_i32, %c0_i32_0, %c0_i32_1 : i32, i32, i32
  }
  func.func @transform_4(%arg0: i32) -> (i32, i32, i32) {
    %c0_i32 = arith.constant 0 : i32
    %c0_i32_0 = arith.constant 0 : i32
    %c0_i32_1 = arith.constant 0 : i32
    %c0_i32_2 = arith.constant 0 : i32
    return %c0_i32, %c0_i32_0, %c0_i32_1 : i32, i32, i32
  }
  func.func @transform_5(%arg0: i32) -> (i32, i32, i32) {
    %c0_i32 = arith.constant 0 : i32
    %c0_i32_0 = arith.constant 0 : i32
    %c0_i32_1 = arith.constant 0 : i32
    %c0_i32_2 = arith.constant 0 : i32
    return %c0_i32, %c0_i32_0, %c0_i32_1 : i32, i32, i32
  }
  func.func @transform_6(%arg0: i32) -> (i32, i32, i32) {
    %c0_i32 = arith.constant 0 : i32
    %c0_i32_0 = arith.constant 0 : i32
    %c0_i32_1 = arith.constant 0 : i32
    %c0_i32_2 = arith.constant 0 : i32
    return %c0_i32, %c0_i32_0, %c0_i32_1 : i32, i32, i32
  }
  func.func @transform_7(%arg0: i32) -> (i32, i32, i32) {
    %c0_i32 = arith.constant 0 : i32
    %c0_i32_0 = arith.constant 0 : i32
    %c0_i32_1 = arith.constant 0 : i32
    %c0_i32_2 = arith.constant 0 : i32
    return %c0_i32, %c0_i32_0, %c0_i32_1 : i32, i32, i32
  }
  func.func @transform_8(%arg0: i32) -> (i32, i32) {
    %c0_i32 = arith.constant 0 : i32
    %c0_i32_0 = arith.constant 0 : i32
    return %arg0, %c0_i32 : i32, i32
  }
  func.func @transform_9(%arg0: i32) -> (i32, i32) {
    %c0_i32 = arith.constant 0 : i32
    %c0_i32_0 = arith.constant 0 : i32
    return %arg0, %c0_i32 : i32, i32
  }
}

</mosaic_0001>

<llo_original>
// kernel: tpu_custom_call.1
$region0: #{tpu_custom_call.1}
  #allocation0 [shape = 'u32[]', space=smem, size = 0x4, offset = 0x4, fixed_abs, tag = 'smem constant byte address 0x4 - core index']
  #allocation1 [shape = 'u32[72,128]{1,0:T(1,128)}', space=vmem, size = 0x9000, scoped, tag = 'internal scratch']
  %s0 = inlined_call_operand.vmem [shape: f32[8,8], index: 0, kind: input, shape index: {}]
  %s1 = inlined_call_operand.vmem [shape: f32[4,1,8], index: 1, kind: input, shape index: {}]
  %s2 = inlined_call_operand.vmem [shape: bf16[4,8,128], index: 2, kind: input, shape index: {}]
  %s3 = inlined_call_operand.vmem [shape: f32[4,1,128], index: 3, kind: input, shape index: {}]
  %s4 = inlined_call_operand.vmem [shape: bf16[4,128,128], index: 4, kind: input, shape index: {}]
  %s5 = inlined_call_operand.hbm [shape: f32[4,1,128], index: 5, kind: input, shape index: {}]
  %s6 = inlined_call_operand.vmem [shape: bf16[4,128,16], index: 6, kind: input, shape index: {}]
  %s7 = inlined_call_operand.hbm [shape: f32[4,1,16], index: 7, kind: input, shape index: {}]
  %s8 = inlined_call_operand.hbm [shape: f32[8,8], index: 8, kind: output, shape index: {0}]
  %s9 = inlined_call_operand.vmem [shape: f32[8,1], index: 9, kind: output, shape index: {1}]
  %10 = xla_tuple %s8, %s9
  %s11 = sld [smem:[#allocation0]]
  $region58: #{tpu_custom_call.1} parent=0
    _
  %s13 = ssub.s32 1, %s11
  %s14 = scalar_select 0, %s13, %s11
  $region1: #{tpu_custom_call.1} parent=0
    #allocation2 [shape = 'u8[2048]{0}', space=vmem, size = 0x800, scoped, tag = 'input window, operand 5, single buffered']
    #allocation3 [shape = 's32[1]{0}', space=sflag, size = 0x4, scoped, tag = 'scoped memory for tpu_custom_call.1']
    #allocation4 [shape = 's32[1]{0}', space=sflag, size = 0x4, scoped, tag = 'scoped memory for tpu_custom_call.1']
    #allocation5 [shape = 'u8[2048]{0}', space=vmem, size = 0x800, scoped, tag = 'input window, operand 7, single buffered']
    #allocation6 [shape = 's32[1]{0}', space=sflag, size = 0x4, scoped, tag = 'scoped memory for tpu_custom_call.1']
    #allocation7 [shape = 'u8[4096]{0}', space=vmem, size = 0x1000, scoped, tag = 'output window, operand 0, single buffered']
    %15 = vsyncpa [#allocation3], 0
    %16 = vsyncpa [#allocation6], 0
    %17 = vsyncpa [#allocation4], 0
    // Predicated region
    $region2: #{tpu_custom_call.1} parent=1 // pred_check
      _
    $region3: #{tpu_custom_call.1} parent=1 // pred_check_branch
      %19 = sbr.rel (0) target = $region5
    $region4: #{tpu_custom_call.1} parent=1 // pred_region
      _
    $region5: #{tpu_custom_call.1} parent=1 // pred_fallthru
      _
    // Predicated region
    $region6: #{tpu_custom_call.1} parent=1 // pred_check
      _
    $region7: #{tpu_custom_call.1} parent=1 // pred_check_branch
      %21 = sbr.rel (0) target = $region9
    $region8: #{tpu_custom_call.1} parent=1 // pred_region
      _
    $region9: #{tpu_custom_call.1} parent=1 // pred_fallthru
      _
    // Predicated region
    $region10: #{tpu_custom_call.1} parent=1 // pred_check
      _
    $region11: #{tpu_custom_call.1} parent=1 // pred_check_branch
      %23 = sbr.rel (0) target = $region13
    $region12: #{tpu_custom_call.1} parent=1 // pred_region
      _
    $region13: #{tpu_custom_call.1} parent=1 // pred_fallthru
      _
    // Predicated region
    $region14: #{tpu_custom_call.1} parent=1 // pred_check
      _
    $region15: #{tpu_custom_call.1} parent=1 // pred_check_branch
      %25 = sbr.rel (0) target = $region17
    $region16: #{tpu_custom_call.1} parent=1 // pred_region
      _
    $region17: #{tpu_custom_call.1} parent=1 // pred_fallthru
      _
    // Predicated region
    $region18: #{tpu_custom_call.1} parent=1 // pred_check
      _
    $region19: #{tpu_custom_call.1} parent=1 // pred_check_branch
      %27 = sbr.rel (0) target = $region21
    $region20: #{tpu_custom_call.1} parent=1 // pred_region
      _
    $region21: #{tpu_custom_call.1} parent=1 // pred_fallthru
      _
    // Predicated region
    $region22: #{tpu_custom_call.1} parent=1 // pred_check
      _
    $region23: #{tpu_custom_call.1} parent=1 // pred_check_branch
      %29 = sbr.rel (0) target = $region25
    $region24: #{tpu_custom_call.1} parent=1 // pred_region
      %31 = vsyncadd [#allocation3], 0
      %s32 = sshll.u32 %s5, 4
      %s33 = int_to_ptr.hbm [resolvable:$true] %s32
      %s34 = sshll.u32 [#allocation2], 4
      %s35 = int_to_ptr.vmem [resolvable:$true] %s34
      %40 = dma.hbm_to_vmem [thread:$0]  %s33, 64, %s35, [#allocation3], 16, 16, 1
    $region25: #{tpu_custom_call.1} parent=1 // pred_fallthru
      _
    // Predicated region
    $region26: #{tpu_custom_call.1} parent=1 // pred_check
      _
    $region27: #{tpu_custom_call.1} parent=1 // pred_check_branch
      %42 = sbr.rel (0) target = $region29
    $region28: #{tpu_custom_call.1} parent=1 // pred_region
      _
    $region29: #{tpu_custom_call.1} parent=1 // pred_fallthru
      _
    // Predicated region
    $region30: #{tpu_custom_call.1} parent=1 // pred_check
      _
    $region31: #{tpu_custom_call.1} parent=1 // pred_check_branch
      %44 = sbr.rel (0) target = $region33
    $region32: #{tpu_custom_call.1} parent=1 // pred_region
      %46 = vsyncadd [#allocation6], 0
      %s47 = sshll.u32 %s7, 4
      %s48 = int_to_ptr.hbm [resolvable:$true] %s47
      %s49 = sshll.u32 [#allocation5], 4
      %s50 = int_to_ptr.vmem [resolvable:$true] %s49
      %55 = dma.hbm_to_vmem [thread:$0]  %s48, 64, %s50, [#allocation6], 16, 16, 1
    $region33: #{tpu_custom_call.1} parent=1 // pred_fallthru
      _
    // Predicated region
    $region34: #{tpu_custom_call.1} parent=1 // pred_check
      _
    $region35: #{tpu_custom_call.1} parent=1 // pred_check_branch
      %57 = sbr.rel (0) target = $region37
    $region36: #{tpu_custom_call.1} parent=1 // pred_region
      %59 = dma.done [#allocation3], 64
    $region37: #{tpu_custom_call.1} parent=1 // pred_fallthru
      _
    // Predicated region
    $region38: #{tpu_custom_call.1} parent=1 // pred_check
      _
    $region39: #{tpu_custom_call.1} parent=1 // pred_check_branch
      %61 = sbr.rel (0) target = $region41
    $region40: #{tpu_custom_call.1} parent=1 // pred_region
      %63 = dma.done [#allocation6], 64
    $region41: #{tpu_custom_call.1} parent=1 // pred_fallthru
      _
    %v65 = vld [vmem:[%s0] sm:$0xff]
    %s66 = scalar_lea.vmem %s1, 3
    %v67 = vld [vmem:[%s66] sm:$0x1]
    %v68 = vsub.f32 1.0, %v67
    %v70 = vperm.slane %v67, 0
    %v72 = vmul.f32 %v70, %v65
    %v73 = vpack.c.bf16 %v72, %v72
    %s74 = scalar_lea.vmem %s2, 12
    %v75 = vld [vmem:[%s74] sm:$0xf]
    %s76 = scalar_lea.vmem %s3, 3
    %v77 = vld [vmem:[%s76] sm:$0x1]
    %v79 = vperm.slane %v77, 0
    %vm81 = vcmask 64512
    %v83 = vsel %vm81, %v73, 0
    %vm85 = vcmask 1043456
    %v87 = vsel %vm85, %v75, 0
    %89 = vmatpush.bf16.msra.mxu0 0
    %90 = vmatpush.bf16.msra.mxu0 0
    %91 = vmatpush.bf16.msra.mxu0 0
    %92 = vmatpush.bf16.msra.mxu0 0
    %93 = vmatpush.bf16.msra.mxu0 0
    %94 = vmatpush.bf16.msra.mxu0 0
    %95 = vmatpush.bf16.msra.mxu0 0
    %96 = vmatpush.bf16.msra.mxu0 %v87
    %97 = vmatmul.bf16.gmra.mxu0 %v83
    %v98 = vpop.f32.mrf.mxu0
    %v99 = vadd.f32 %v79, %v98
    %v100 = vpop.f32.mrf.mxu0
    %101 = vdwg.mxu0
    %vm102 = vcmp.ge.f32.partialorder %v99, 0.0
    %v103 = vmul.f32 %v99, 0.01
    %v104 = vsel %vm102, %v99, %v103
    %v105 = vpack.c.bf16 %v104, %v104
    %s106 = scalar_lea.vmem %s4, 192
    %v107 = vld [vmem:[%s106] sm:$0xf]
    %v108 = vld [vmem:[%s106 + $0x4] sm:$0xf]
    %v109 = vld [vmem:[%s106 + $0x8] sm:$0xf]
    %v110 = vld [vmem:[%s106 + $0xc] sm:$0xf]
    %v111 = vld [vmem:[%s106 + $0x10] sm:$0xf]
    %v112 = vld [vmem:[%s106 + $0x14] sm:$0xf]
    %v113 = vld [vmem:[%s106 + $0x18] sm:$0xf]
    %v114 = vld [vmem:[%s106 + $0x1c] sm:$0xf]
    %v115 = vld [vmem:[%s106 + $0x20] sm:$0xf]
    %v116 = vld [vmem:[%s106 + $0x24] sm:$0xf]
    %v117 = vld [vmem:[%s106 + $0x28] sm:$0xf]
    %v118 = vld [vmem:[%s106 + $0x2c] sm:$0xf]
    %v119 = vld [vmem:[%s106 + $0x30] sm:$0xf]
    %v120 = vld [vmem:[%s106 + $0x34] sm:$0xf]
    %v121 = vld [vmem:[%s106 + $0x38] sm:$0xf]
    %v122 = vld [vmem:[%s106 + $0x3c] sm:$0xf]
    %s123 = scalar_lea.vmem [#allocation2], 3
    %v124 = vld [vmem:[%s123] sm:$0x1]
    %v126 = vperm.slane %v124, 0
    %v144 = vunpack.c.l.b16 %v107
    %v145 = vunpack.c.l.b16 %v108
    %v146 = vunpack.c.l.b16 %v109
    %v147 = vunpack.c.l.b16 %v110
    %v148 = vunpack.c.l.b16 %v111
    %v149 = vunpack.c.l.b16 %v112
    %v150 = vunpack.c.l.b16 %v113
    %v151 = vunpack.c.l.b16 %v114
    %v152 = vunpack.c.l.b16 %v115
    %v153 = vunpack.c.l.b16 %v116
    %v154 = vunpack.c.l.b16 %v117
    %v155 = vunpack.c.l.b16 %v118
    %v156 = vunpack.c.l.b16 %v119
    %v157 = vunpack.c.l.b16 %v120
    %v158 = vunpack.c.l.b16 %v121
    %v159 = vunpack.c.l.b16 %v122
    %v160 = vpack.c.b16 %v145, %v144
    %v161 = vpack.c.b16 %v147, %v146
    %v162 = vpack.c.b16 %v149, %v148
    %v163 = vpack.c.b16 %v151, %v150
    %v164 = vpack.c.b16 %v153, %v152
    %v165 = vpack.c.b16 %v155, %v154
    %v166 = vpack.c.b16 %v157, %v156
    %v167 = vpack.c.b16 %v159, %v158
    %176 = vmatpush.bf16.msra.mxu0 %v167
    %177 = vmatpush.bf16.msra.mxu0 %v166
    %178 = vmatpush.bf16.msra.mxu0 %v165
    %179 = vmatpush.bf16.msra.mxu0 %v164
    %180 = vmatpush.bf16.msra.mxu0 %v163
    %181 = vmatpush.bf16.msra.mxu0 %v162
    %182 = vmatpush.bf16.msra.mxu0 %v161
    %183 = vmatpush.bf16.msra.mxu0 %v160
    %184 = vmatmul.bf16.gmra.mxu0 %v105
    %v185 = vpop.f32.mrf.mxu0
    %v186 = vadd.f32 %v126, %v185
    %v187 = vpop.f32.mrf.mxu0
    %188 = vdwg.mxu0
    %vm189 = vcmp.ge.f32.partialorder %v186, 0.0
    %v190 = vmul.f32 %v186, 0.01
    %v191 = vsel %vm189, %v186, %v190
    %v192 = vpack.c.bf16 %v191, %v191
    %s193 = scalar_lea.vmem %s6, 192
    %v194 = vld [vmem:[%s193] sm:$0xf]
    %v195 = vld [vmem:[%s193 + $0x4] sm:$0xf]
    %v196 = vld [vmem:[%s193 + $0x8] sm:$0xf]
    %v197 = vld [vmem:[%s193 + $0xc] sm:$0xf]
    %v198 = vld [vmem:[%s193 + $0x10] sm:$0xf]
    %v199 = vld [vmem:[%s193 + $0x14] sm:$0xf]
    %v200 = vld [vmem:[%s193 + $0x18] sm:$0xf]
    %v201 = vld [vmem:[%s193 + $0x1c] sm:$0xf]
    %v202 = vld [vmem:[%s193 + $0x20] sm:$0xf]
    %v203 = vld [vmem:[%s193 + $0x24] sm:$0xf]
    %v204 = vld [vmem:[%s193 + $0x28] sm:$0xf]
    %v205 = vld [vmem:[%s193 + $0x2c] sm:$0xf]
    %v206 = vld [vmem:[%s193 + $0x30] sm:$0xf]
    %v207 = vld [vmem:[%s193 + $0x34] sm:$0xf]
    %v208 = vld [vmem:[%s193 + $0x38] sm:$0xf]
    %v209 = vld [vmem:[%s193 + $0x3c] sm:$0xf]
    %s210 = scalar_lea.vmem [#allocation5], 3
    %v211 = vld [vmem:[%s210] sm:$0x1]
    %v213 = vperm.slane %v211, 0
    %v231 = vunpack.c.l.b16 %v194
    %v232 = vunpack.c.l.b16 %v195
    %v233 = vunpack.c.l.b16 %v196
    %v234 = vunpack.c.l.b16 %v197
    %v235 = vunpack.c.l.b16 %v198
    %v236 = vunpack.c.l.b16 %v199
    %v237 = vunpack.c.l.b16 %v200
    %v238 = vunpack.c.l.b16 %v201
    %v239 = vunpack.c.l.b16 %v202
    %v240 = vunpack.c.l.b16 %v203
    %v241 = vunpack.c.l.b16 %v204
    %v242 = vunpack.c.l.b16 %v205
    %v243 = vunpack.c.l.b16 %v206
    %v244 = vunpack.c.l.b16 %v207
    %v245 = vunpack.c.l.b16 %v208
    %v246 = vunpack.c.l.b16 %v209
    %v247 = vpack.c.b16 %v232, %v231
    %v248 = vpack.c.b16 %v234, %v233
    %v249 = vpack.c.b16 %v236, %v235
    %v250 = vpack.c.b16 %v238, %v237
    %v251 = vpack.c.b16 %v240, %v239
    %v252 = vpack.c.b16 %v242, %v241
    %v253 = vpack.c.b16 %v244, %v243
    %v254 = vpack.c.b16 %v246, %v245
    %263 = vmatpush.bf16.msra.mxu0 %v254
    %264 = vmatpush.bf16.msra.mxu0 %v253
    %265 = vmatpush.bf16.msra.mxu0 %v252
    %266 = vmatpush.bf16.msra.mxu0 %v251
    %267 = vmatpush.bf16.msra.mxu0 %v250
    %268 = vmatpush.bf16.msra.mxu0 %v249
    %269 = vmatpush.bf16.msra.mxu0 %v248
    %270 = vmatpush.bf16.msra.mxu0 %v247
    %271 = vmatmul.bf16.gmra.mxu0 %v192
    %v272 = vpop.f32.mrf.mxu0
    %v273 = vadd.f32 %v213, %v272
    %v274 = vpop.f32.mrf.mxu0
    %275 = vdwg.mxu0
    %v276 = vtanh.pop %v273
    %v278 = vperm.slane %v68, 0
    %v280 = vmul.f32 %v276, %v278
    %281 = vrot.lane.b32.xlu0 %v278, 8
    %v282 = vpop.permute.xlu0 %281
    %v284 = vmul.f32 %v273, %v282
    %286 = vrot.lane.b32.xlu0 %v284, 120
    %v287 = vpop.permute.xlu0 %286
    %v289 = vsub.f32 %v65, %v287
    %v290 = vmul.f32 %v278, %v289
    %v291 = vsub.f32 0.0, %v280
    %v292 = vmul.f32 %v291, 1.442695
    %v293 = vpow.pop %v292
    %v294 = vmul.f32 %v290, %v293
    %v295 = vadd.f32 %v294, %v72
    %v296 = vsel %vm81, %v280, 0.0
    %297 = vadd.xlane.f32.xlu0 %v296
    %v298 = vpop.xlane.xlu0 %297
    %v299 = vsub.f32 0.0, %v298
    %s300 = scalar_lea.vmem %s1, 2
    %v301 = vld [vmem:[%s300] sm:$0x1]
    %v302 = vsub.f32 1.0, %v301
    %v304 = vperm.slane %v301, 0
    %v306 = vmul.f32 %v304, %v295
    %v307 = vpack.c.bf16 %v306, %v306
    %s308 = scalar_lea.vmem %s2, 8
    %v309 = vld [vmem:[%s308] sm:$0xf]
    %s310 = scalar_lea.vmem %s3, 2
    %v311 = vld [vmem:[%s310] sm:$0x1]
    %v313 = vperm.slane %v311, 0
    %v316 = vsel %vm81, %v307, 0
    %v319 = vsel %vm85, %v309, 0
    %321 = vmatpush.bf16.msra.mxu0 0
    %322 = vmatpush.bf16.msra.mxu0 0
    %323 = vmatpush.bf16.msra.mxu0 0
    %324 = vmatpush.bf16.msra.mxu0 0
    %325 = vmatpush.bf16.msra.mxu0 0
    %326 = vmatpush.bf16.msra.mxu0 0
    %327 = vmatpush.bf16.msra.mxu0 0
    %328 = vmatpush.bf16.msra.mxu0 %v319
    %329 = vmatmul.bf16.gmra.mxu0 %v316
    %v330 = vpop.f32.mrf.mxu0
    %v331 = vadd.f32 %v313, %v330
    %v332 = vpop.f32.mrf.mxu0
    %333 = vdwg.mxu0
    %vm334 = vcmp.ge.f32.partialorder %v331, 0.0
    %v335 = vmul.f32 %v331, 0.01
    %v336 = vsel %vm334, %v331, %v335
    %v337 = vpack.c.bf16 %v336, %v336
    %s338 = scalar_lea.vmem %s4, 128
    %v339 = vld [vmem:[%s338] sm:$0xf]
    %v340 = vld [vmem:[%s338 + $0x4] sm:$0xf]
    %v341 = vld [vmem:[%s338 + $0x8] sm:$0xf]
    %v342 = vld [vmem:[%s338 + $0xc] sm:$0xf]
    %v343 = vld [vmem:[%s338 + $0x10] sm:$0xf]
    %v344 = vld [vmem:[%s338 + $0x14] sm:$0xf]
    %v345 = vld [vmem:[%s338 + $0x18] sm:$0xf]
    %v346 = vld [vmem:[%s338 + $0x1c] sm:$0xf]
    %v347 = vld [vmem:[%s338 + $0x20] sm:$0xf]
    %v348 = vld [vmem:[%s338 + $0x24] sm:$0xf]
    %v349 = vld [vmem:[%s338 + $0x28] sm:$0xf]
    %v350 = vld [vmem:[%s338 + $0x2c] sm:$0xf]
    %v351 = vld [vmem:[%s338 + $0x30] sm:$0xf]
    %v352 = vld [vmem:[%s338 + $0x34] sm:$0xf]
    %v353 = vld [vmem:[%s338 + $0x38] sm:$0xf]
    %v354 = vld [vmem:[%s338 + $0x3c] sm:$0xf]
    %s355 = scalar_lea.vmem [#allocation2], 2
    %v356 = vld [vmem:[%s355] sm:$0x1]
    %v358 = vperm.slane %v356, 0
    %v376 = vunpack.c.l.b16 %v339
    %v377 = vunpack.c.l.b16 %v340
    %v378 = vunpack.c.l.b16 %v341
    %v379 = vunpack.c.l.b16 %v342
    %v380 = vunpack.c.l.b16 %v343
    %v381 = vunpack.c.l.b16 %v344
    %v382 = vunpack.c.l.b16 %v345
    %v383 = vunpack.c.l.b16 %v346
    %v384 = vunpack.c.l.b16 %v347
    %v385 = vunpack.c.l.b16 %v348
    %v386 = vunpack.c.l.b16 %v349
    %v387 = vunpack.c.l.b16 %v350
    %v388 = vunpack.c.l.b16 %v351
    %v389 = vunpack.c.l.b16 %v352
    %v390 = vunpack.c.l.b16 %v353
    %v391 = vunpack.c.l.b16 %v354
    %v392 = vpack.c.b16 %v377, %v376
    %v393 = vpack.c.b16 %v379, %v378
    %v394 = vpack.c.b16 %v381, %v380
    %v395 = vpack.c.b16 %v383, %v382
    %v396 = vpack.c.b16 %v385, %v384
    %v397 = vpack.c.b16 %v387, %v386
    %v398 = vpack.c.b16 %v389, %v388
    %v399 = vpack.c.b16 %v391, %v390
    %408 = vmatpush.bf16.msra.mxu0 %v399
    %409 = vmatpush.bf16.msra.mxu0 %v398
    %410 = vmatpush.bf16.msra.mxu0 %v397
    %411 = vmatpush.bf16.msra.mxu0 %v396
    %412 = vmatpush.bf16.msra.mxu0 %v395
    %413 = vmatpush.bf16.msra.mxu0 %v394
    %414 = vmatpush.bf16.msra.mxu0 %v393
    %415 = vmatpush.bf16.msra.mxu0 %v392
    %416 = vmatmul.bf16.gmra.mxu0 %v337
    %v417 = vpop.f32.mrf.mxu0
    %v418 = vadd.f32 %v358, %v417
    %v419 = vpop.f32.mrf.mxu0
    %420 = vdwg.mxu0
    %vm421 = vcmp.ge.f32.partialorder %v418, 0.0
    %v422 = vmul.f32 %v418, 0.01
    %v423 = vsel %vm421, %v418, %v422
    %v424 = vpack.c.bf16 %v423, %v423
    %s425 = scalar_lea.vmem %s6, 128
    %v426 = vld [vmem:[%s425] sm:$0xf]
    %v427 = vld [vmem:[%s425 + $0x4] sm:$0xf]
    %v428 = vld [vmem:[%s425 + $0x8] sm:$0xf]
    %v429 = vld [vmem:[%s425 + $0xc] sm:$0xf]
    %v430 = vld [vmem:[%s425 + $0x10] sm:$0xf]
    %v431 = vld [vmem:[%s425 + $0x14] sm:$0xf]
    %v432 = vld [vmem:[%s425 + $0x18] sm:$0xf]
    %v433 = vld [vmem:[%s425 + $0x1c] sm:$0xf]
    %v434 = vld [vmem:[%s425 + $0x20] sm:$0xf]
    %v435 = vld [vmem:[%s425 + $0x24] sm:$0xf]
    %v436 = vld [vmem:[%s425 + $0x28] sm:$0xf]
    %v437 = vld [vmem:[%s425 + $0x2c] sm:$0xf]
    %v438 = vld [vmem:[%s425 + $0x30] sm:$0xf]
    %v439 = vld [vmem:[%s425 + $0x34] sm:$0xf]
    %v440 = vld [vmem:[%s425 + $0x38] sm:$0xf]
    %v441 = vld [vmem:[%s425 + $0x3c] sm:$0xf]
    %s442 = scalar_lea.vmem [#allocation5], 2
    %v443 = vld [vmem:[%s442] sm:$0x1]
    %v445 = vperm.slane %v443, 0
    %v463 = vunpack.c.l.b16 %v426
    %v464 = vunpack.c.l.b16 %v427
    %v465 = vunpack.c.l.b16 %v428
    %v466 = vunpack.c.l.b16 %v429
    %v467 = vunpack.c.l.b16 %v430
    %v468 = vunpack.c.l.b16 %v431
    %v469 = vunpack.c.l.b16 %v432
    %v470 = vunpack.c.l.b16 %v433
    %v471 = vunpack.c.l.b16 %v434
    %v472 = vunpack.c.l.b16 %v435
    %v473 = vunpack.c.l.b16 %v436
    %v474 = vunpack.c.l.b16 %v437
    %v475 = vunpack.c.l.b16 %v438
    %v476 = vunpack.c.l.b16 %v439
    %v477 = vunpack.c.l.b16 %v440
    %v478 = vunpack.c.l.b16 %v441
    %v479 = vpack.c.b16 %v464, %v463
    %v480 = vpack.c.b16 %v466, %v465
    %v481 = vpack.c.b16 %v468, %v467
    %v482 = vpack.c.b16 %v470, %v469
    %v483 = vpack.c.b16 %v472, %v471
    %v484 = vpack.c.b16 %v474, %v473
    %v485 = vpack.c.b16 %v476, %v475
    %v486 = vpack.c.b16 %v478, %v477
    %495 = vmatpush.bf16.msra.mxu0 %v486
    %496 = vmatpush.bf16.msra.mxu0 %v485
    %497 = vmatpush.bf16.msra.mxu0 %v484
    %498 = vmatpush.bf16.msra.mxu0 %v483
    %499 = vmatpush.bf16.msra.mxu0 %v482
    %500 = vmatpush.bf16.msra.mxu0 %v481
    %501 = vmatpush.bf16.msra.mxu0 %v480
    %502 = vmatpush.bf16.msra.mxu0 %v479
    %503 = vmatmul.bf16.gmra.mxu0 %v424
    %v504 = vpop.f32.mrf.mxu0
    %v505 = vadd.f32 %v445, %v504
    %v506 = vpop.f32.mrf.mxu0
    %507 = vdwg.mxu0
    %v508 = vtanh.pop %v505
    %v510 = vperm.slane %v302, 0
    %v512 = vmul.f32 %v508, %v510
    %513 = vrot.lane.b32.xlu0 %v510, 8
    %v514 = vpop.permute.xlu0 %513
    %v516 = vmul.f32 %v505, %v514
    %518 = vrot.lane.b32.xlu0 %v516, 120
    %v519 = vpop.permute.xlu0 %518
    %v521 = vsub.f32 %v295, %v519
    %v522 = vmul.f32 %v510, %v521
    %v523 = vsub.f32 0.0, %v512
    %v524 = vmul.f32 %v523, 1.442695
    %v525 = vpow.pop %v524
    %v526 = vmul.f32 %v522, %v525
    %v527 = vadd.f32 %v526, %v306
    %v528 = vsel %vm81, %v512, 0.0
    %529 = vadd.xlane.f32.xlu0 %v528
    %v530 = vpop.xlane.xlu0 %529
    %v531 = vsub.f32 %v299, %v530
    %s532 = scalar_lea.vmem %s1, 1
    %v533 = vld [vmem:[%s532] sm:$0x1]
    %v534 = vsub.f32 1.0, %v533
    %v536 = vperm.slane %v533, 0
    %v538 = vmul.f32 %v536, %v527
    %v539 = vpack.c.bf16 %v538, %v538
    %s540 = scalar_lea.vmem %s2, 4
    %v541 = vld [vmem:[%s540] sm:$0xf]
    %s542 = scalar_lea.vmem %s3, 1
    %v543 = vld [vmem:[%s542] sm:$0x1]
    %v545 = vperm.slane %v543, 0
    %v548 = vsel %vm81, %v539, 0
    %v551 = vsel %vm85, %v541, 0
    %553 = vmatpush.bf16.msra.mxu0 0
    %554 = vmatpush.bf16.msra.mxu0 0
    %555 = vmatpush.bf16.msra.mxu0 0
    %556 = vmatpush.bf16.msra.mxu0 0
    %557 = vmatpush.bf16.msra.mxu0 0
    %558 = vmatpush.bf16.msra.mxu0 0
    %559 = vmatpush.bf16.msra.mxu0 0
    %560 = vmatpush.bf16.msra.mxu0 %v551
    %561 = vmatmul.bf16.gmra.mxu0 %v548
    %v562 = vpop.f32.mrf.mxu0
    %v563 = vadd.f32 %v545, %v562
    %v564 = vpop.f32.mrf.mxu0
    %565 = vdwg.mxu0
    %vm566 = vcmp.ge.f32.partialorder %v563, 0.0
    %v567 = vmul.f32 %v563, 0.01
    %v568 = vsel %vm566, %v563, %v567
    %v569 = vpack.c.bf16 %v568, %v568
    %s570 = scalar_lea.vmem %s4, 64
    %v571 = vld [vmem:[%s570] sm:$0xf]
    %v572 = vld [vmem:[%s570 + $0x4] sm:$0xf]
    %v573 = vld [vmem:[%s570 + $0x8] sm:$0xf]
    %v574 = vld [vmem:[%s570 + $0xc] sm:$0xf]
    %v575 = vld [vmem:[%s570 + $0x10] sm:$0xf]
    %v576 = vld [vmem:[%s570 + $0x14] sm:$0xf]
    %v577 = vld [vmem:[%s570 + $0x18] sm:$0xf]
    %v578 = vld [vmem:[%s570 + $0x1c] sm:$0xf]
    %v579 = vld [vmem:[%s570 + $0x20] sm:$0xf]
    %v580 = vld [vmem:[%s570 + $0x24] sm:$0xf]
    %v581 = vld [vmem:[%s570 + $0x28] sm:$0xf]
    %v582 = vld [vmem:[%s570 + $0x2c] sm:$0xf]
    %v583 = vld [vmem:[%s570 + $0x30] sm:$0xf]
    %v584 = vld [vmem:[%s570 + $0x34] sm:$0xf]
    %v585 = vld [vmem:[%s570 + $0x38] sm:$0xf]
    %v586 = vld [vmem:[%s570 + $0x3c] sm:$0xf]
    %s587 = scalar_lea.vmem [#allocation2], 1
    %v588 = vld [vmem:[%s587] sm:$0x1]
    %v590 = vperm.slane %v588, 0
    %v608 = vunpack.c.l.b16 %v571
    %v609 = vunpack.c.l.b16 %v572
    %v610 = vunpack.c.l.b16 %v573
    %v611 = vunpack.c.l.b16 %v574
    %v612 = vunpack.c.l.b16 %v575
    %v613 = vunpack.c.l.b16 %v576
    %v614 = vunpack.c.l.b16 %v577
    %v615 = vunpack.c.l.b16 %v578
    %v616 = vunpack.c.l.b16 %v579
    %v617 = vunpack.c.l.b16 %v580
    %v618 = vunpack.c.l.b16 %v581
    %v619 = vunpack.c.l.b16 %v582
    %v620 = vunpack.c.l.b16 %v583
    %v621 = vunpack.c.l.b16 %v584
    %v622 = vunpack.c.l.b16 %v585
    %v623 = vunpack.c.l.b16 %v586
    %v624 = vpack.c.b16 %v609, %v608
    %v625 = vpack.c.b16 %v611, %v610
    %v626 = vpack.c.b16 %v613, %v612
    %v627 = vpack.c.b16 %v615, %v614
    %v628 = vpack.c.b16 %v617, %v616
    %v629 = vpack.c.b16 %v619, %v618
    %v630 = vpack.c.b16 %v621, %v620
    %v631 = vpack.c.b16 %v623, %v622
    %640 = vmatpush.bf16.msra.mxu0 %v631
    %641 = vmatpush.bf16.msra.mxu0 %v630
    %642 = vmatpush.bf16.msra.mxu0 %v629
    %643 = vmatpush.bf16.msra.mxu0 %v628
    %644 = vmatpush.bf16.msra.mxu0 %v627
    %645 = vmatpush.bf16.msra.mxu0 %v626
    %646 = vmatpush.bf16.msra.mxu0 %v625
    %647 = vmatpush.bf16.msra.mxu0 %v624
    %648 = vmatmul.bf16.gmra.mxu0 %v569
    %v649 = vpop.f32.mrf.mxu0
    %v650 = vadd.f32 %v590, %v649
    %v651 = vpop.f32.mrf.mxu0
    %652 = vdwg.mxu0
    %vm653 = vcmp.ge.f32.partialorder %v650, 0.0
    %v654 = vmul.f32 %v650, 0.01
    %v655 = vsel %vm653, %v650, %v654
    %v656 = vpack.c.bf16 %v655, %v655
    %s657 = scalar_lea.vmem %s6, 64
    %v658 = vld [vmem:[%s657] sm:$0xf]
    %v659 = vld [vmem:[%s657 + $0x4] sm:$0xf]
    %v660 = vld [vmem:[%s657 + $0x8] sm:$0xf]
    %v661 = vld [vmem:[%s657 + $0xc] sm:$0xf]
    %v662 = vld [vmem:[%s657 + $0x10] sm:$0xf]
    %v663 = vld [vmem:[%s657 + $0x14] sm:$0xf]
    %v664 = vld [vmem:[%s657 + $0x18] sm:$0xf]
    %v665 = vld [vmem:[%s657 + $0x1c] sm:$0xf]
    %v666 = vld [vmem:[%s657 + $0x20] sm:$0xf]
    %v667 = vld [vmem:[%s657 + $0x24] sm:$0xf]
    %v668 = vld [vmem:[%s657 + $0x28] sm:$0xf]
    %v669 = vld [vmem:[%s657 + $0x2c] sm:$0xf]
    %v670 = vld [vmem:[%s657 + $0x30] sm:$0xf]
    %v671 = vld [vmem:[%s657 + $0x34] sm:$0xf]
    %v672 = vld [vmem:[%s657 + $0x38] sm:$0xf]
    %v673 = vld [vmem:[%s657 + $0x3c] sm:$0xf]
    %s674 = scalar_lea.vmem [#allocation5], 1
    %v675 = vld [vmem:[%s674] sm:$0x1]
    %v677 = vperm.slane %v675, 0
    %v695 = vunpack.c.l.b16 %v658
    %v696 = vunpack.c.l.b16 %v659
    %v697 = vunpack.c.l.b16 %v660
    %v698 = vunpack.c.l.b16 %v661
    %v699 = vunpack.c.l.b16 %v662
    %v700 = vunpack.c.l.b16 %v663
    %v701 = vunpack.c.l.b16 %v664
    %v702 = vunpack.c.l.b16 %v665
    %v703 = vunpack.c.l.b16 %v666
    %v704 = vunpack.c.l.b16 %v667
    %v705 = vunpack.c.l.b16 %v668
    %v706 = vunpack.c.l.b16 %v669
    %v707 = vunpack.c.l.b16 %v670
    %v708 = vunpack.c.l.b16 %v671
    %v709 = vunpack.c.l.b16 %v672
    %v710 = vunpack.c.l.b16 %v673
    %v711 = vpack.c.b16 %v696, %v695
    %v712 = vpack.c.b16 %v698, %v697
    %v713 = vpack.c.b16 %v700, %v699
    %v714 = vpack.c.b16 %v702, %v701
    %v715 = vpack.c.b16 %v704, %v703
    %v716 = vpack.c.b16 %v706, %v705
    %v717 = vpack.c.b16 %v708, %v707
    %v718 = vpack.c.b16 %v710, %v709
    %727 = vmatpush.bf16.msra.mxu0 %v718
    %728 = vmatpush.bf16.msra.mxu0 %v717
    %729 = vmatpush.bf16.msra.mxu0 %v716
    %730 = vmatpush.bf16.msra.mxu0 %v715
    %731 = vmatpush.bf16.msra.mxu0 %v714
    %732 = vmatpush.bf16.msra.mxu0 %v713
    %733 = vmatpush.bf16.msra.mxu0 %v712
    %734 = vmatpush.bf16.msra.mxu0 %v711
    %735 = vmatmul.bf16.gmra.mxu0 %v656
    %v736 = vpop.f32.mrf.mxu0
    %v737 = vadd.f32 %v677, %v736
    %v738 = vpop.f32.mrf.mxu0
    %739 = vdwg.mxu0
    %v740 = vtanh.pop %v737
    %v742 = vperm.slane %v534, 0
    %v744 = vmul.f32 %v740, %v742
    %745 = vrot.lane.b32.xlu0 %v742, 8
    %v746 = vpop.permute.xlu0 %745
    %v748 = vmul.f32 %v737, %v746
    %750 = vrot.lane.b32.xlu0 %v748, 120
    %v751 = vpop.permute.xlu0 %750
    %v753 = vsub.f32 %v527, %v751
    %v754 = vmul.f32 %v742, %v753
    %v755 = vsub.f32 0.0, %v744
    %v756 = vmul.f32 %v755, 1.442695
    %v757 = vpow.pop %v756
    %v758 = vmul.f32 %v754, %v757
    %v759 = vadd.f32 %v758, %v538
    %v760 = vsel %vm81, %v744, 0.0
    %761 = vadd.xlane.f32.xlu0 %v760
    %v762 = vpop.xlane.xlu0 %761
    %v763 = vsub.f32 %v531, %v762
    %v764 = vld [vmem:[%s1] sm:$0x1]
    %v765 = vsub.f32 1.0, %v764
    %v767 = vperm.slane %v764, 0
    %v769 = vmul.f32 %v767, %v759
    %v770 = vpack.c.bf16 %v769, %v769
    %v771 = vld [vmem:[%s2] sm:$0xf]
    %v772 = vld [vmem:[%s3] sm:$0x1]
    %v774 = vperm.slane %v772, 0
    %v777 = vsel %vm81, %v770, 0
    %v780 = vsel %vm85, %v771, 0
    %782 = vmatpush.bf16.msra.mxu0 0
    %783 = vmatpush.bf16.msra.mxu0 0
    %784 = vmatpush.bf16.msra.mxu0 0
    %785 = vmatpush.bf16.msra.mxu0 0
    %786 = vmatpush.bf16.msra.mxu0 0
    %787 = vmatpush.bf16.msra.mxu0 0
    %788 = vmatpush.bf16.msra.mxu0 0
    %789 = vmatpush.bf16.msra.mxu0 %v780
    %790 = vmatmul.bf16.gmra.mxu0 %v777
    %v791 = vpop.f32.mrf.mxu0
    %v792 = vadd.f32 %v774, %v791
    %v793 = vpop.f32.mrf.mxu0
    %794 = vdwg.mxu0
    %vm795 = vcmp.ge.f32.partialorder %v792, 0.0
    %v796 = vmul.f32 %v792, 0.01
    %v797 = vsel %vm795, %v792, %v796
    %v798 = vpack.c.bf16 %v797, %v797
    %v799 = vld [vmem:[%s4] sm:$0xf]
    %v800 = vld [vmem:[%s4 + $0x4] sm:$0xf]
    %v801 = vld [vmem:[%s4 + $0x8] sm:$0xf]
    %v802 = vld [vmem:[%s4 + $0xc] sm:$0xf]
    %v803 = vld [vmem:[%s4 + $0x10] sm:$0xf]
    %v804 = vld [vmem:[%s4 + $0x14] sm:$0xf]
    %v805 = vld [vmem:[%s4 + $0x18] sm:$0xf]
    %v806 = vld [vmem:[%s4 + $0x1c] sm:$0xf]
    %v807 = vld [vmem:[%s4 + $0x20] sm:$0xf]
    %v808 = vld [vmem:[%s4 + $0x24] sm:$0xf]
    %v809 = vld [vmem:[%s4 + $0x28] sm:$0xf]
    %v810 = vld [vmem:[%s4 + $0x2c] sm:$0xf]
    %v811 = vld [vmem:[%s4 + $0x30] sm:$0xf]
    %v812 = vld [vmem:[%s4 + $0x34] sm:$0xf]
    %v813 = vld [vmem:[%s4 + $0x38] sm:$0xf]
    %v814 = vld [vmem:[%s4 + $0x3c] sm:$0xf]
    %v815 = vld [vmem:[#allocation2] sm:$0x1]
    %v817 = vperm.slane %v815, 0
    %v835 = vunpack.c.l.b16 %v799
    %v836 = vunpack.c.l.b16 %v800
    %v837 = vunpack.c.l.b16 %v801
    %v838 = vunpack.c.l.b16 %v802
    %v839 = vunpack.c.l.b16 %v803
    %v840 = vunpack.c.l.b16 %v804
    %v841 = vunpack.c.l.b16 %v805
    %v842 = vunpack.c.l.b16 %v806
    %v843 = vunpack.c.l.b16 %v807
    %v844 = vunpack.c.l.b16 %v808
    %v845 = vunpack.c.l.b16 %v809
    %v846 = vunpack.c.l.b16 %v810
    %v847 = vunpack.c.l.b16 %v811
    %v848 = vunpack.c.l.b16 %v812
    %v849 = vunpack.c.l.b16 %v813
    %v850 = vunpack.c.l.b16 %v814
    %v851 = vpack.c.b16 %v836, %v835
    %v852 = vpack.c.b16 %v838, %v837
    %v853 = vpack.c.b16 %v840, %v839
    %v854 = vpack.c.b16 %v842, %v841
    %v855 = vpack.c.b16 %v844, %v843
    %v856 = vpack.c.b16 %v846, %v845
    %v857 = vpack.c.b16 %v848, %v847
    %v858 = vpack.c.b16 %v850, %v849
    %867 = vmatpush.bf16.msra.mxu0 %v858
    %868 = vmatpush.bf16.msra.mxu0 %v857
    %869 = vmatpush.bf16.msra.mxu0 %v856
    %870 = vmatpush.bf16.msra.mxu0 %v855
    %871 = vmatpush.bf16.msra.mxu0 %v854
    %872 = vmatpush.bf16.msra.mxu0 %v853
    %873 = vmatpush.bf16.msra.mxu0 %v852
    %874 = vmatpush.bf16.msra.mxu0 %v851
    %875 = vmatmul.bf16.gmra.mxu0 %v798
    %v876 = vpop.f32.mrf.mxu0
    %v877 = vadd.f32 %v817, %v876
    %v878 = vpop.f32.mrf.mxu0
    %879 = vdwg.mxu0
    %vm880 = vcmp.ge.f32.partialorder %v877, 0.0
    %v881 = vmul.f32 %v877, 0.01
    %v882 = vsel %vm880, %v877, %v881
    %v883 = vpack.c.bf16 %v882, %v882
    %v884 = vld [vmem:[%s6] sm:$0xf]
    %v885 = vld [vmem:[%s6 + $0x4] sm:$0xf]
    %v886 = vld [vmem:[%s6 + $0x8] sm:$0xf]
    %v887 = vld [vmem:[%s6 + $0xc] sm:$0xf]
    %v888 = vld [vmem:[%s6 + $0x10] sm:$0xf]
    %v889 = vld [vmem:[%s6 + $0x14] sm:$0xf]
    %v890 = vld [vmem:[%s6 + $0x18] sm:$0xf]
    %v891 = vld [vmem:[%s6 + $0x1c] sm:$0xf]
    %v892 = vld [vmem:[%s6 + $0x20] sm:$0xf]
    %v893 = vld [vmem:[%s6 + $0x24] sm:$0xf]
    %v894 = vld [vmem:[%s6 + $0x28] sm:$0xf]
    %v895 = vld [vmem:[%s6 + $0x2c] sm:$0xf]
    %v896 = vld [vmem:[%s6 + $0x30] sm:$0xf]
    %v897 = vld [vmem:[%s6 + $0x34] sm:$0xf]
    %v898 = vld [vmem:[%s6 + $0x38] sm:$0xf]
    %v899 = vld [vmem:[%s6 + $0x3c] sm:$0xf]
    %v900 = vld [vmem:[#allocation5] sm:$0x1]
    %v902 = vperm.slane %v900, 0
    %v920 = vunpack.c.l.b16 %v884
    %v921 = vunpack.c.l.b16 %v885
    %v922 = vunpack.c.l.b16 %v886
    %v923 = vunpack.c.l.b16 %v887
    %v924 = vunpack.c.l.b16 %v888
    %v925 = vunpack.c.l.b16 %v889
    %v926 = vunpack.c.l.b16 %v890
    %v927 = vunpack.c.l.b16 %v891
    %v928 = vunpack.c.l.b16 %v892
    %v929 = vunpack.c.l.b16 %v893
    %v930 = vunpack.c.l.b16 %v894
    %v931 = vunpack.c.l.b16 %v895
    %v932 = vunpack.c.l.b16 %v896
    %v933 = vunpack.c.l.b16 %v897
    %v934 = vunpack.c.l.b16 %v898
    %v935 = vunpack.c.l.b16 %v899
    %v936 = vpack.c.b16 %v921, %v920
    %v937 = vpack.c.b16 %v923, %v922
    %v938 = vpack.c.b16 %v925, %v924
    %v939 = vpack.c.b16 %v927, %v926
    %v940 = vpack.c.b16 %v929, %v928
    %v941 = vpack.c.b16 %v931, %v930
    %v942 = vpack.c.b16 %v933, %v932
    %v943 = vpack.c.b16 %v935, %v934
    %952 = vmatpush.bf16.msra.mxu0 %v943
    %953 = vmatpush.bf16.msra.mxu0 %v942
    %954 = vmatpush.bf16.msra.mxu0 %v941
    %955 = vmatpush.bf16.msra.mxu0 %v940
    %956 = vmatpush.bf16.msra.mxu0 %v939
    %957 = vmatpush.bf16.msra.mxu0 %v938
    %958 = vmatpush.bf16.msra.mxu0 %v937
    %959 = vmatpush.bf16.msra.mxu0 %v936
    %960 = vmatmul.bf16.gmra.mxu0 %v883
    %v961 = vpop.f32.mrf.mxu0
    %v962 = vadd.f32 %v902, %v961
    %v963 = vpop.f32.mrf.mxu0
    %964 = vdwg.mxu0
    %v965 = vtanh.pop %v962
    %v967 = vperm.slane %v765, 0
    %v969 = vmul.f32 %v965, %v967
    %970 = vrot.lane.b32.xlu0 %v967, 8
    %v971 = vpop.permute.xlu0 %970
    %v973 = vmul.f32 %v962, %v971
    %975 = vrot.lane.b32.xlu0 %v973, 120
    %v976 = vpop.permute.xlu0 %975
    %v978 = vsub.f32 %v759, %v976
    %v979 = vmul.f32 %v967, %v978
    %v980 = vsub.f32 0.0, %v969
    %v981 = vmul.f32 %v980, 1.442695
    %v982 = vpow.pop %v981
    %v983 = vmul.f32 %v979, %v982
    %v984 = vadd.f32 %v983, %v769
    %v985 = vsel %vm81, %v969, 0.0
    %986 = vadd.xlane.f32.xlu0 %v985
    %v987 = vpop.xlane.xlu0 %986
    %v988 = vsub.f32 %v763, %v987
    %989 = vst.msk [vmem:[#allocation7] sm:$0xff] %vm81, %v984
    %vm990 = vcmask 7168
    %991 = vst.msk [vmem:[%s9] sm:$0xff] %vm990, %v988
    // Predicated region
    $region42: #{tpu_custom_call.1} parent=1 // pred_check
      _
    $region43: #{tpu_custom_call.1} parent=1 // pred_check_branch
      %993 = sbr.rel (0) target = $region45
    $region44: #{tpu_custom_call.1} parent=1 // pred_region
      %995 = vsyncadd [#allocation4], 0
      %s997 = sshll.u32 [#allocation7], 4
      %s998 = int_to_ptr.vmem [resolvable:$true] %s997
      %s999 = sshll.u32 %s8, 4
      %s1000 = int_to_ptr.hbm [resolvable:$true] %s999
      %1002 = dma.vmem_to_hbm [thread:$0]  %s998, 128, %s1000, [#allocation4]
    $region45: #{tpu_custom_call.1} parent=1 // pred_fallthru
      _
    // Predicated region
    $region46: #{tpu_custom_call.1} parent=1 // pred_check
      _
    $region47: #{tpu_custom_call.1} parent=1 // pred_check_branch
      %1004 = sbr.rel (0) target = $region49
    $region48: #{tpu_custom_call.1} parent=1 // pred_region
      _
    $region49: #{tpu_custom_call.1} parent=1 // pred_fallthru
      _
    // Predicated region
    $region50: #{tpu_custom_call.1} parent=1 // pred_check
      _
    $region51: #{tpu_custom_call.1} parent=1 // pred_check_branch
      %1006 = sbr.rel (0) target = $region53
    $region52: #{tpu_custom_call.1} parent=1 // pred_region
      %1008 = dma.done [#allocation4], 128
    $region53: #{tpu_custom_call.1} parent=1 // pred_fallthru
      _
    // Predicated region
    $region54: #{tpu_custom_call.1} parent=1 // pred_check
      _
    $region55: #{tpu_custom_call.1} parent=1 // pred_check_branch
      %1010 = sbr.rel (0) target = $region57
    $region56: #{tpu_custom_call.1} parent=1 // pred_region
      _
    $region57: #{tpu_custom_call.1} parent=1 // pred_fallthru
      _
    %1011 = vsyncpa [#allocation3], 1
    %1012 = vsyncpa [#allocation6], 1
    %1013 = vsyncpa [#allocation4], 1

</llo_original>
